<compile_context>
chip_gen: v6e
topology: v6e:2x2x1
jax: 0.10.0
libtpu: 0.0.40
codegen_flags: <defaults>
</compile_context>

<pallas_src>
import math

import jax
import jax.numpy as jnp
from jax.experimental import pallas as pl
from jax.experimental.pallas import tpu as pltpu

# ----- model sizes (module implies: 3-channel image in, n_features out) -----
N_FEATURES = 32          # stands in for efficientnet_b3's classifier.in_features (1536)
NUM_CLASSES = 18
STEM_K = 3
STEM_STRIDE = 2
STEM_PAD = 1

# ----- lane/sublane-dense padded sizes -----
C_PAD = 128              # padded feature/channel width (multiple of 128 lanes)
K_PAD = 128              # padded im2col patch width (kh*kw*Cin + bias tap = 28 -> 128)
NCLS_PAD = 128           # padded class count (18 -> 128)
TB = 8                   # batch rows per block (sublane multiple)
THW_C = 32               # pixels per in-kernel chunk (TB*THW_C = 256 rows per MXU push)

# ArcMarginProduct constants (s=30, m=0.5, easy_margin=False)
ARC_S = 30.0
ARC_M = 0.5
COS_M = math.cos(ARC_M)
SIN_M = math.sin(ARC_M)
TH = math.cos(math.pi - ARC_M)
MM = math.sin(math.pi - ARC_M) * ARC_M


# ---------------- Pallas kernel ----------------

def _make_fused_kernel(inv_hw, n_chunks):
    """Fused: stem matmul(+bias) + SiLU + global-average-pool + classifier + ArcMargin."""

    def kernel(lab_ref, p_ref, ws_ref, wc_ref, bc_ref, wn_ref, feat_ref, logits_ref):
        bi = pl.program_id(0)
        ws = ws_ref[...]                                            # bf16 [K_PAD, C_PAD]

        # ---- stem conv + SiLU + pool, chunked so the live f32 slab stays small ----
        def chunk(c, acc):
            start = pl.multiple_of(c * THW_C, THW_C)
            p = p_ref[:, pl.ds(start, THW_C), :].reshape(TB * THW_C, K_PAD)   # bf16
            stem = jnp.dot(p, ws, preferred_element_type=jnp.float32)        # bias folded
            stem = stem * jax.nn.sigmoid(stem)                               # SiLU, f32
            # TODO(synk): on v6e/v7x the SiLU could run in bf16 (halves VALU/EUP work);
            # kept f32 for v5e-safe lowering and tighter parity.
            return acc + jnp.sum(stem.reshape(TB, THW_C, C_PAD), axis=1)

        acc = jax.lax.fori_loop(0, n_chunks, chunk,
                                jnp.zeros((TB, C_PAD), jnp.float32), unroll=True)

        # ---- global average pool + classifier Linear (the module's forward output) ----
        pooled = acc * inv_hw                                        # f32 [TB, C_PAD]
        feat = jnp.dot(pooled.astype(jnp.bfloat16), wc_ref[...],
                       preferred_element_type=jnp.float32) + bc_ref[...]
        feat_ref[...] = feat

        # ---- ArcMarginProduct head, fused (no second launch, no HBM round-trip) ----
        inv_norm = jax.lax.rsqrt(jnp.sum(feat * feat, axis=1, keepdims=True) + 1e-24)
        fn = (feat * inv_norm).astype(jnp.bfloat16)
        cosine = jnp.dot(fn, wn_ref[...], preferred_element_type=jnp.float32)
        sine = jnp.sqrt(jnp.clip(1.0 - cosine * cosine, 0.0, 1.0))
        phi = cosine * COS_M - sine * SIN_M
        phi = jnp.where(cosine > TH, phi, cosine - MM)

        # one_hot.scatter_ as iota==label compare against SMEM scalars.
        rows = jax.lax.broadcasted_iota(jnp.int32, cosine.shape, 0)
        cols = jax.lax.broadcasted_iota(jnp.int32, cosine.shape, 1)
        one_hot = jnp.zeros_like(cosine)
        for r in range(TB):                                          # TB=8, static
            lab_r = lab_ref[bi * TB + r]
            one_hot = jnp.where((rows == r) & (cols == lab_r), 1.0, one_hot)

        logits_ref[...] = ARC_S * (cosine + one_hot * (phi - cosine))

    return kernel


# ---------------- plain-JAX glue ----------------

def im2col(x_nhwc, kh, kw, stride, pad):
    x_p = jnp.pad(x_nhwc, ((0, 0), (pad, pad), (pad, pad), (0, 0)))
    Hp, Wp = x_p.shape[1], x_p.shape[2]
    Ho = (Hp - kh) // stride + 1
    Wo = (Wp - kw) // stride + 1
    cols = []
    for di in range(kh):
        for dj in range(kw):
            cols.append(
                x_p[:, di:di + stride * Ho:stride, dj:dj + stride * Wo:stride, :]
            )
    return jnp.concatenate(cols, axis=-1), Ho, Wo  # [B, Ho, Wo, kh*kw*Cin]


def init_params(key):
    k1, k2, k3, k4, k5 = jax.random.split(key, 5)
    patch_dim = STEM_K * STEM_K * 3
    w_stem = jax.random.normal(k1, (patch_dim, N_FEATURES), jnp.float32) / math.sqrt(
        patch_dim
    )
    b_stem = 0.01 * jax.random.normal(k2, (1, N_FEATURES), jnp.float32)
    # classifier Linear(n_features, n_features): xavier_uniform weight,
    # bias ~ U(-1/sqrt(num_classes), 1/sqrt(num_classes))  (as in __init__)
    limit = math.sqrt(6.0 / (N_FEATURES + N_FEATURES))
    w_cls = jax.random.uniform(k3, (N_FEATURES, N_FEATURES), jnp.float32, -limit, limit)
    stdv = 1.0 / math.sqrt(NUM_CLASSES)
    b_cls = jax.random.uniform(k4, (1, N_FEATURES), jnp.float32, -stdv, stdv)
    # ArcMargin weight (out_features, in_features), xavier_uniform
    lim_arc = math.sqrt(6.0 / (NUM_CLASSES + N_FEATURES))
    w_arc = jax.random.uniform(
        k5, (NUM_CLASSES, N_FEATURES), jnp.float32, -lim_arc, lim_arc
    )
    return dict(w_stem=w_stem, b_stem=b_stem, w_cls=w_cls, b_cls=b_cls, w_arc=w_arc)


@jax.jit
def fused_forward_arc(params, x_nchw, label):
    """Returns (features, arc_logits).

    features == PretrainModelTimmArc.forward(x) (backbone -> pool -> Linear(C, C));
    arc_logits == ArcMarginProduct.forward(features, label).
    """
    B = x_nchw.shape[0]
    x_nhwc = jnp.transpose(x_nchw, (0, 2, 3, 1))
    patches, Ho, Wo = im2col(x_nhwc, STEM_K, STEM_K, STEM_STRIDE, STEM_PAD)
    HW = Ho * Wo
    K = STEM_K * STEM_K * x_nhwc.shape[-1]
    assert HW % THW_C == 0, "pixel count must tile by THW_C"
    n_chunks = HW // THW_C

    B_PAD = pl.cdiv(B, TB) * TB
    n_b = B_PAD // TB

    # lane-dense bf16 patch slab with a constant-one bias-tap column at index K.
    patches = patches.reshape(B, HW, K)
    p_pad = jnp.zeros((B_PAD, HW, K_PAD), jnp.float32)
    p_pad = p_pad.at[:B, :, :K].set(patches)
    p_pad = p_pad.at[:, :, K].set(1.0)
    p_pad = p_pad.astype(jnp.bfloat16)

    # stem weight with b_stem folded into row K; classifier weight; pre-broadcast bias.
    ws = jnp.zeros((K_PAD, C_PAD), jnp.float32)
    ws = ws.at[:K, :N_FEATURES].set(params["w_stem"])
    ws = ws.at[K, :N_FEATURES].set(params["b_stem"][0])
    ws = ws.astype(jnp.bfloat16)
    wc = (jnp.zeros((C_PAD, C_PAD), jnp.float32)
          .at[:N_FEATURES, :N_FEATURES].set(params["w_cls"]).astype(jnp.bfloat16))
    bc = (jnp.zeros((TB, C_PAD), jnp.float32)
          .at[:, :N_FEATURES].set(jnp.broadcast_to(params["b_cls"], (TB, N_FEATURES))))

    # ArcMargin weight row-normalization hoisted (static per step), transposed,
    # 128-padded so the kernel matmul's lane dim is the padded class axis.
    w = params["w_arc"]
    wn = w * jax.lax.rsqrt(jnp.sum(w * w, axis=1, keepdims=True) + 1e-24)
    wn_t = (jnp.zeros((C_PAD, NCLS_PAD), jnp.float32)
            .at[:N_FEATURES, :NUM_CLASSES].set(wn.T).astype(jnp.bfloat16))

    # label -> SMEM via scalar prefetch (pad rows get -1 so they never match iota).
    lab = jnp.pad(label.astype(jnp.int32), (0, B_PAD - B), constant_values=-1)

    kernel = _make_fused_kernel(1.0 / HW, n_chunks)

    feat_pad, logits_pad = pl.pallas_call(
        kernel,
        out_shape=(jax.ShapeDtypeStruct((B_PAD, C_PAD), jnp.float32),
                   jax.ShapeDtypeStruct((B_PAD, NCLS_PAD), jnp.float32)),
        grid_spec=pltpu.PrefetchScalarGridSpec(
            num_scalar_prefetch=1,
            grid=(n_b,),
            in_specs=[
                pl.BlockSpec((TB, HW, K_PAD), lambda bi, lab: (bi, 0, 0)),
                pl.BlockSpec((K_PAD, C_PAD), lambda bi, lab: (0, 0)),
                pl.BlockSpec((C_PAD, C_PAD), lambda bi, lab: (0, 0)),
                pl.BlockSpec((TB, C_PAD), lambda bi, lab: (0, 0)),
                pl.BlockSpec((C_PAD, NCLS_PAD), lambda bi, lab: (0, 0)),
            ],
            out_specs=[
                pl.BlockSpec((TB, C_PAD), lambda bi, lab: (bi, 0)),
                pl.BlockSpec((TB, NCLS_PAD), lambda bi, lab: (bi, 0)),
            ],
        ),
        compiler_params=pltpu.CompilerParams(
            dimension_semantics=("parallel",)),
    )(lab, p_pad, ws, wc, bc, wn_t)

    # padded rows / padded classes are sliced away here so they cannot leak downstream.
    return feat_pad[:B, :N_FEATURES], logits_pad[:B, :NUM_CLASSES]


def pretrain_model_timm_arc_forward(params, x_nchw):
    """forward(x) = self.model(x): backbone features -> pool -> Linear(C, C)."""
    feats, _ = fused_forward_arc(
        params, x_nchw, jnp.zeros((x_nchw.shape[0],), jnp.int32))
    return feats


# ---------------- pure-JAX f32 references (correctness check only) ----------------

def reference_forward(params, x_nchw):
    x_nhwc = jnp.transpose(x_nchw, (0, 2, 3, 1))
    patches, Ho, Wo = im2col(x_nhwc, STEM_K, STEM_K, STEM_STRIDE, STEM_PAD)
    B = x_nchw.shape[0]
    p2 = patches.reshape(B * Ho * Wo, -1)
    acc = p2 @ params["w_stem"] + params["b_stem"]
    acc = acc * jax.nn.sigmoid(acc)
    pooled = acc.reshape(B, Ho * Wo, N_FEATURES).mean(axis=1)
    return pooled @ params["w_cls"] + params["b_cls"]


def reference_arc(params, features, label):
    fn = features / jnp.maximum(
        jnp.linalg.norm(features, axis=1, keepdims=True), 1e-12
    )
    wn = params["w_arc"] / jnp.maximum(
        jnp.linalg.norm(params["w_arc"], axis=1, keepdims=True), 1e-12
    )
    cos = fn @ wn.T
    sin = jnp.sqrt(jnp.clip(1.0 - cos * cos, 0.0, 1.0))
    phi = jnp.where(cos > TH, cos * COS_M - sin * SIN_M, cos - MM)
    oh = jax.nn.one_hot(label, NUM_CLASSES, dtype=jnp.float32)
    return ARC_S * (oh * phi + (1.0 - oh) * cos)


if __name__ == "__main__":
    key = jax.random.PRNGKey(0)
    kp, kx, kl = jax.random.split(key, 3)
    params = init_params(kp)

    x = jax.random.normal(kx, (2, 3, 16, 16), jnp.float32)          # NCHW
    label = jax.random.randint(kl, (2,), 0, NUM_CLASSES)

    feats, logits = jax.block_until_ready(fused_forward_arc(params, x, label))
    assert feats.shape == (2, N_FEATURES)
    assert logits.shape == (2, NUM_CLASSES)

    ref_f = reference_forward(params, x)
    # tolerances are bf16-MXU-operand level (f32 accumulation throughout).
    assert jnp.allclose(feats, ref_f, atol=3e-2, rtol=3e-2), "forward mismatch"

    ref_l = reference_arc(params, feats, label)
    assert jnp.allclose(logits, ref_l, atol=1e-1, rtol=5e-2), "arc mismatch"

    print("KERNEL_OK")
</pallas_src>

<mosaic_0001>
module attributes {stable_mosaic.version = 11 : i64} {
  func.func @kernel(%arg0: i32, %arg1: memref<8xi32, #tpu.memory_space<smem>>, %arg2: memref<8x64x128xbf16, #tpu.memory_space<vmem>>, %arg3: memref<128x128xbf16, #tpu.memory_space<vmem>>, %arg4: memref<128x128xbf16, #tpu.memory_space<vmem>>, %arg5: memref<8x128xf32, #tpu.memory_space<vmem>>, %arg6: memref<128x128xbf16, #tpu.memory_space<vmem>>, %arg7: memref<8x128xf32, #tpu.memory_space<vmem>>, %arg8: memref<8x128xf32, #tpu.memory_space<vmem>>) attributes {dimension_semantics = [#tpu.dimension_semantics<parallel>], iteration_bounds = array<i64: 1>, scalar_prefetch = 1 : i64, scratch_operands = 0 : i64, tpu.core_type = #tpu.core_type<tc>, window_params = [{transform_indices = @transform_0, window_bounds = array<i64: 8, 64, 128>}, {pipeline_mode = #tpu.pipeline_mode<synchronous>, transform_indices = @transform_1, window_bounds = array<i64: 128, 128>}, {pipeline_mode = #tpu.pipeline_mode<synchronous>, transform_indices = @transform_2, window_bounds = array<i64: 128, 128>}, {pipeline_mode = #tpu.pipeline_mode<synchronous>, transform_indices = @transform_3, window_bounds = array<i64: 8, 128>}, {pipeline_mode = #tpu.pipeline_mode<synchronous>, transform_indices = @transform_4, window_bounds = array<i64: 128, 128>}, {transform_indices = @transform_5, window_bounds = array<i64: 8, 128>}, {transform_indices = @transform_6, window_bounds = array<i64: 8, 128>}]} {
    %c0 = arith.constant 0 : index
    %c0_0 = arith.constant 0 : index
    %0 = vector.load %arg3[%c0, %c0_0] : memref<128x128xbf16, #tpu.memory_space<vmem>>, vector<128x128xbf16>
    %cst = arith.constant 0.000000e+00 : f32
    %1 = vector.broadcast %cst : f32 to vector<8x128xf32>
    %c0_i32 = arith.constant 0 : i32
    %c32_i32 = arith.constant 32 : i32
    %2 = arith.muli %c0_i32, %c32_i32 : i32
    %3 = tpu.assume_multiple %2, 32 : i32
    %c0_1 = arith.constant 0 : index
    %4 = arith.index_cast %3 : i32 to index
    %c0_2 = arith.constant 0 : index
    %5 = vector.load %arg2[%c0_1, %4, %c0_2] : memref<8x64x128xbf16, #tpu.memory_space<vmem>>, vector<8x32x128xbf16>
    %6 = vector.shape_cast %5 : vector<8x32x128xbf16> to vector<256x128xbf16>
    %cst_3 = arith.constant dense<0.000000e+00> : vector<256x128xf32>
    %7 = tpu.matmul %6, %0, %cst_3 {dimension_numbers = #tpu.dot_dimension_numbers<[1], [0], [0], [1], [0, 0, 1, 1], [], []>} : vector<256x128xbf16>, vector<128x128xbf16>, vector<256x128xf32> -> vector<256x128xf32>
    %8 = arith.negf %7 : vector<256x128xf32>
    %9 = math.exp %8 : vector<256x128xf32>
    %cst_4 = arith.constant 1.000000e+00 : f32
    %10 = vector.broadcast %cst_4 : f32 to vector<256x128xf32>
    %11 = arith.addf %10, %9 : vector<256x128xf32>
    %12 = arith.divf %10, %11 : vector<256x128xf32>
    %13 = arith.mulf %7, %12 : vector<256x128xf32>
    %14 = vector.shape_cast %13 : vector<256x128xf32> to vector<8x32x128xf32>
    %cst_5 = arith.constant dense<0.000000e+00> : vector<8x128xf32>
    %15 = vector.multi_reduction <add>, %14, %cst_5 [1] : vector<8x32x128xf32> to vector<8x128xf32>
    %16 = arith.addf %1, %15 : vector<8x128xf32>
    %c1_i32 = arith.constant 1 : i32
    %c32_i32_6 = arith.constant 32 : i32
    %17 = arith.muli %c1_i32, %c32_i32_6 : i32
    %18 = tpu.assume_multiple %17, 32 : i32
    %c0_7 = arith.constant 0 : index
    %19 = arith.index_cast %18 : i32 to index
    %c0_8 = arith.constant 0 : index
    %20 = vector.load %arg2[%c0_7, %19, %c0_8] : memref<8x64x128xbf16, #tpu.memory_space<vmem>>, vector<8x32x128xbf16>
    %21 = vector.shape_cast %20 : vector<8x32x128xbf16> to vector<256x128xbf16>
    %cst_9 = arith.constant dense<0.000000e+00> : vector<256x128xf32>
    %22 = tpu.matmul %21, %0, %cst_9 {dimension_numbers = #tpu.dot_dimension_numbers<[1], [0], [0], [1], [0, 0, 1, 1], [], []>} : vector<256x128xbf16>, vector<128x128xbf16>, vector<256x128xf32> -> vector<256x128xf32>
    %23 = arith.negf %22 : vector<256x128xf32>
    %24 = math.exp %23 : vector<256x128xf32>
    %cst_10 = arith.constant 1.000000e+00 : f32
    %25 = vector.broadcast %cst_10 : f32 to vector<256x128xf32>
    %26 = arith.addf %25, %24 : vector<256x128xf32>
    %27 = arith.divf %25, %26 : vector<256x128xf32>
    %28 = arith.mulf %22, %27 : vector<256x128xf32>
    %29 = vector.shape_cast %28 : vector<256x128xf32> to vector<8x32x128xf32>
    %cst_11 = arith.constant dense<0.000000e+00> : vector<8x128xf32>
    %30 = vector.multi_reduction <add>, %29, %cst_11 [1] : vector<8x32x128xf32> to vector<8x128xf32>
    %31 = arith.addf %16, %30 : vector<8x128xf32>
    %c2_i32 = arith.constant 2 : i32
    %cst_12 = arith.constant 1.562500e-02 : f32
    %32 = vector.broadcast %cst_12 : f32 to vector<8x128xf32>
    %33 = arith.mulf %31, %32 : vector<8x128xf32>
    %34 = arith.truncf %33 : vector<8x128xf32> to vector<8x128xbf16>
    %c0_13 = arith.constant 0 : index
    %c0_14 = arith.constant 0 : index
    %35 = vector.load %arg4[%c0_13, %c0_14] : memref<128x128xbf16, #tpu.memory_space<vmem>>, vector<128x128xbf16>
    %cst_15 = arith.constant dense<0.000000e+00> : vector<8x128xf32>
    %36 = tpu.matmul %34, %35, %cst_15 {dimension_numbers = #tpu.dot_dimension_numbers<[1], [0], [0], [1], [0, 0, 1, 1], [], []>} : vector<8x128xbf16>, vector<128x128xbf16>, vector<8x128xf32> -> vector<8x128xf32>
    %c0_16 = arith.constant 0 : index
    %c0_17 = arith.constant 0 : index
    %37 = vector.load %arg5[%c0_16, %c0_17] : memref<8x128xf32, #tpu.memory_space<vmem>>, vector<8x128xf32>
    %38 = arith.addf %36, %37 : vector<8x128xf32>
    %c0_18 = arith.constant 0 : index
    %c0_19 = arith.constant 0 : index
    %39 = vector.load %arg7[%c0_18, %c0_19] : memref<8x128xf32, #tpu.memory_space<vmem>>, vector<8x128xf32>
    tpu.vector_store %arg7[%c0_18, %c0_19], %38 {strides = array<i32>} : memref<8x128xf32, #tpu.memory_space<vmem>>, vector<8x128xf32>,
    %40 = arith.mulf %38, %38 : vector<8x128xf32>
    %cst_20 = arith.constant dense<0.000000e+00> : vector<8xf32>
    %41 = vector.multi_reduction <add>, %40, %cst_20 [1] : vector<8x128xf32> to vector<8xf32>
    %42 = vector.shape_cast %41 : vector<8xf32> to vector<8x1xf32>
    %cst_21 = arith.constant 1.000000e-24 : f32
    %43 = vector.broadcast %cst_21 : f32 to vector<8x1xf32>
    %44 = arith.addf %42, %43 : vector<8x1xf32>
    %45 = math.rsqrt %44 : vector<8x1xf32>
    %46 = vector.broadcast %45 : vector<8x1xf32> to vector<8x128xf32>
    %47 = arith.mulf %38, %46 : vector<8x128xf32>
    %48 = arith.truncf %47 : vector<8x128xf32> to vector<8x128xbf16>
    %c0_22 = arith.constant 0 : index
    %c0_23 = arith.constant 0 : index
    %49 = vector.load %arg6[%c0_22, %c0_23] : memref<128x128xbf16, #tpu.memory_space<vmem>>, vector<128x128xbf16>
    %cst_24 = arith.constant dense<0.000000e+00> : vector<8x128xf32>
    %50 = tpu.matmul %48, %49, %cst_24 {dimension_numbers = #tpu.dot_dimension_numbers<[1], [0], [0], [1], [0, 0, 1, 1], [], []>} : vector<8x128xbf16>, vector<128x128xbf16>, vector<8x128xf32> -> vector<8x128xf32>
    %51 = arith.mulf %50, %50 : vector<8x128xf32>
    %cst_25 = arith.constant 1.000000e+00 : f32
    %52 = vector.broadcast %cst_25 : f32 to vector<8x128xf32>
    %53 = arith.subf %52, %51 : vector<8x128xf32>
    %cst_26 = arith.constant 0.000000e+00 : f32
    %cst_27 = arith.constant 1.000000e+00 : f32
    %54 = vector.broadcast %cst_26 : f32 to vector<8x128xf32>
    %55 = arith.maximumf %54, %53 : vector<8x128xf32>
    %56 = vector.broadcast %cst_27 : f32 to vector<8x128xf32>
    %57 = arith.minimumf %56, %55 : vector<8x128xf32>
    %58 = math.sqrt %57 : vector<8x128xf32>
    %cst_28 = arith.constant 0.87758255 : f32
    %59 = vector.broadcast %cst_28 : f32 to vector<8x128xf32>
    %60 = arith.mulf %50, %59 : vector<8x128xf32>
    %cst_29 = arith.constant 0.47942555 : f32
    %61 = vector.broadcast %cst_29 : f32 to vector<8x128xf32>
    %62 = arith.mulf %58, %61 : vector<8x128xf32>
    %63 = arith.subf %60, %62 : vector<8x128xf32>
    %cst_30 = arith.constant -0.87758255 : f32
    %64 = vector.broadcast %cst_30 : f32 to vector<8x128xf32>
    %65 = arith.cmpf ogt, %50, %64 : vector<8x128xf32>
    %cst_31 = arith.constant 0.239712775 : f32
    %66 = vector.broadcast %cst_31 : f32 to vector<8x128xf32>
    %67 = arith.subf %50, %66 : vector<8x128xf32>
    %68 = arith.select %65, %63, %67 : vector<8x128xi1>, vector<8x128xf32>
    %69 = tpu.iota {dimensions = array<i32: 0>} : vector<8x128xi32>
    %70 = tpu.iota {dimensions = array<i32: 1>} : vector<8x128xi32>
    %cst_32 = arith.constant 0.000000e+00 : f32
    %71 = vector.broadcast %cst_32 : f32 to vector<8x128xf32>
    %c8_i32 = arith.constant 8 : i32
    %72 = arith.muli %arg0, %c8_i32 : i32
    %c0_i32_33 = arith.constant 0 : i32
    %73 = arith.addi %72, %c0_i32_33 : i32
    %74 = arith.index_cast %73 : i32 to index
    %75 = memref.load %arg1[%74] : memref<8xi32, #tpu.memory_space<smem>>
    %c0_i32_34 = arith.constant 0 : i32
    %76 = vector.broadcast %c0_i32_34 : i32 to vector<8x128xi32>
    %77 = arith.cmpi eq, %69, %76 : vector<8x128xi32>
    %78 = vector.broadcast %75 : i32 to vector<8x128xi32>
    %79 = arith.cmpi eq, %70, %78 : vector<8x128xi32>
    %80 = arith.andi %77, %79 : vector<8x128xi1>
    %cst_35 = arith.constant 1.000000e+00 : f32
    %81 = vector.broadcast %cst_35 : f32 to vector<8x128xf32>
    %82 = arith.select %80, %81, %71 : vector<8x128xi1>, vector<8x128xf32>
    %c8_i32_36 = arith.constant 8 : i32
    %83 = arith.muli %arg0, %c8_i32_36 : i32
    %c1_i32_37 = arith.constant 1 : i32
    %84 = arith.addi %83, %c1_i32_37 : i32
    %85 = arith.index_cast %84 : i32 to index
    %86 = memref.load %arg1[%85] : memref<8xi32, #tpu.memory_space<smem>>
    %c1_i32_38 = arith.constant 1 : i32
    %87 = vector.broadcast %c1_i32_38 : i32 to vector<8x128xi32>
    %88 = arith.cmpi eq, %69, %87 : vector<8x128xi32>
    %89 = vector.broadcast %86 : i32 to vector<8x128xi32>
    %90 = arith.cmpi eq, %70, %89 : vector<8x128xi32>
    %91 = arith.andi %88, %90 : vector<8x128xi1>
    %cst_39 = arith.constant 1.000000e+00 : f32
    %92 = vector.broadcast %cst_39 : f32 to vector<8x128xf32>
    %93 = arith.select %91, %92, %82 : vector<8x128xi1>, vector<8x128xf32>
    %c8_i32_40 = arith.constant 8 : i32
    %94 = arith.muli %arg0, %c8_i32_40 : i32
    %c2_i32_41 = arith.constant 2 : i32
    %95 = arith.addi %94, %c2_i32_41 : i32
    %96 = arith.index_cast %95 : i32 to index
    %97 = memref.load %arg1[%96] : memref<8xi32, #tpu.memory_space<smem>>
    %c2_i32_42 = arith.constant 2 : i32
    %98 = vector.broadcast %c2_i32_42 : i32 to vector<8x128xi32>
    %99 = arith.cmpi eq, %69, %98 : vector<8x128xi32>
    %100 = vector.broadcast %97 : i32 to vector<8x128xi32>
    %101 = arith.cmpi eq, %70, %100 : vector<8x128xi32>
    %102 = arith.andi %99, %101 : vector<8x128xi1>
    %cst_43 = arith.constant 1.000000e+00 : f32
    %103 = vector.broadcast %cst_43 : f32 to vector<8x128xf32>
    %104 = arith.select %102, %103, %93 : vector<8x128xi1>, vector<8x128xf32>
    %c8_i32_44 = arith.constant 8 : i32
    %105 = arith.muli %arg0, %c8_i32_44 : i32
    %c3_i32 = arith.constant 3 : i32
    %106 = arith.addi %105, %c3_i32 : i32
    %107 = arith.index_cast %106 : i32 to index
    %108 = memref.load %arg1[%107] : memref<8xi32, #tpu.memory_space<smem>>
    %c3_i32_45 = arith.constant 3 : i32
    %109 = vector.broadcast %c3_i32_45 : i32 to vector<8x128xi32>
    %110 = arith.cmpi eq, %69, %109 : vector<8x128xi32>
    %111 = vector.broadcast %108 : i32 to vector<8x128xi32>
    %112 = arith.cmpi eq, %70, %111 : vector<8x128xi32>
    %113 = arith.andi %110, %112 : vector<8x128xi1>
    %cst_46 = arith.constant 1.000000e+00 : f32
    %114 = vector.broadcast %cst_46 : f32 to vector<8x128xf32>
    %115 = arith.select %113, %114, %104 : vector<8x128xi1>, vector<8x128xf32>
    %c8_i32_47 = arith.constant 8 : i32
    %116 = arith.muli %arg0, %c8_i32_47 : i32
    %c4_i32 = arith.constant 4 : i32
    %117 = arith.addi %116, %c4_i32 : i32
    %118 = arith.index_cast %117 : i32 to index
    %119 = memref.load %arg1[%118] : memref<8xi32, #tpu.memory_space<smem>>
    %c4_i32_48 = arith.constant 4 : i32
    %120 = vector.broadcast %c4_i32_48 : i32 to vector<8x128xi32>
    %121 = arith.cmpi eq, %69, %120 : vector<8x128xi32>
    %122 = vector.broadcast %119 : i32 to vector<8x128xi32>
    %123 = arith.cmpi eq, %70, %122 : vector<8x128xi32>
    %124 = arith.andi %121, %123 : vector<8x128xi1>
    %cst_49 = arith.constant 1.000000e+00 : f32
    %125 = vector.broadcast %cst_49 : f32 to vector<8x128xf32>
    %126 = arith.select %124, %125, %115 : vector<8x128xi1>, vector<8x128xf32>
    %c8_i32_50 = arith.constant 8 : i32
    %127 = arith.muli %arg0, %c8_i32_50 : i32
    %c5_i32 = arith.constant 5 : i32
    %128 = arith.addi %127, %c5_i32 : i32
    %129 = arith.index_cast %128 : i32 to index
    %130 = memref.load %arg1[%129] : memref<8xi32, #tpu.memory_space<smem>>
    %c5_i32_51 = arith.constant 5 : i32
    %131 = vector.broadcast %c5_i32_51 : i32 to vector<8x128xi32>
    %132 = arith.cmpi eq, %69, %131 : vector<8x128xi32>
    %133 = vector.broadcast %130 : i32 to vector<8x128xi32>
    %134 = arith.cmpi eq, %70, %133 : vector<8x128xi32>
    %135 = arith.andi %132, %134 : vector<8x128xi1>
    %cst_52 = arith.constant 1.000000e+00 : f32
    %136 = vector.broadcast %cst_52 : f32 to vector<8x128xf32>
    %137 = arith.select %135, %136, %126 : vector<8x128xi1>, vector<8x128xf32>
    %c8_i32_53 = arith.constant 8 : i32
    %138 = arith.muli %arg0, %c8_i32_53 : i32
    %c6_i32 = arith.constant 6 : i32
    %139 = arith.addi %138, %c6_i32 : i32
    %140 = arith.index_cast %139 : i32 to index
    %141 = memref.load %arg1[%140] : memref<8xi32, #tpu.memory_space<smem>>
    %c6_i32_54 = arith.constant 6 : i32
    %142 = vector.broadcast %c6_i32_54 : i32 to vector<8x128xi32>
    %143 = arith.cmpi eq, %69, %142 : vector<8x128xi32>
    %144 = vector.broadcast %141 : i32 to vector<8x128xi32>
    %145 = arith.cmpi eq, %70, %144 : vector<8x128xi32>
    %146 = arith.andi %143, %145 : vector<8x128xi1>
    %cst_55 = arith.constant 1.000000e+00 : f32
    %147 = vector.broadcast %cst_55 : f32 to vector<8x128xf32>
    %148 = arith.select %146, %147, %137 : vector<8x128xi1>, vector<8x128xf32>
    %c8_i32_56 = arith.constant 8 : i32
    %149 = arith.muli %arg0, %c8_i32_56 : i32
    %c7_i32 = arith.constant 7 : i32
    %150 = arith.addi %149, %c7_i32 : i32
    %151 = arith.index_cast %150 : i32 to index
    %152 = memref.load %arg1[%151] : memref<8xi32, #tpu.memory_space<smem>>
    %c7_i32_57 = arith.constant 7 : i32
    %153 = vector.broadcast %c7_i32_57 : i32 to vector<8x128xi32>
    %154 = arith.cmpi eq, %69, %153 : vector<8x128xi32>
    %155 = vector.broadcast %152 : i32 to vector<8x128xi32>
    %156 = arith.cmpi eq, %70, %155 : vector<8x128xi32>
    %157 = arith.andi %154, %156 : vector<8x128xi1>
    %cst_58 = arith.constant 1.000000e+00 : f32
    %158 = vector.broadcast %cst_58 : f32 to vector<8x128xf32>
    %159 = arith.select %157, %158, %148 : vector<8x128xi1>, vector<8x128xf32>
    %160 = arith.subf %68, %50 : vector<8x128xf32>
    %161 = arith.mulf %159, %160 : vector<8x128xf32>
    %162 = arith.addf %50, %161 : vector<8x128xf32>
    %cst_59 = arith.constant 3.000000e+01 : f32
    %163 = vector.broadcast %cst_59 : f32 to vector<8x128xf32>
    %164 = arith.mulf %163, %162 : vector<8x128xf32>
    %c0_60 = arith.constant 0 : index
    %c0_61 = arith.constant 0 : index
    %165 = vector.load %arg8[%c0_60, %c0_61] : memref<8x128xf32, #tpu.memory_space<vmem>>, vector<8x128xf32>
    tpu.vector_store %arg8[%c0_60, %c0_61], %164 {strides = array<i32>} : memref<8x128xf32, #tpu.memory_space<vmem>>, vector<8x128xf32>,
    return
  }
  func.func @transform_0(%arg0: i32, %arg1: memref<8xi32, #tpu.memory_space<smem>>) -> (i32, i32, i32) {
    %c0_i32 = arith.constant 0 : i32
    %c0_i32_0 = arith.constant 0 : i32
    %c0_i32_1 = arith.constant 0 : i32
    return %arg0, %c0_i32, %c0_i32_0 : i32, i32, i32
  }
  func.func @transform_1(%arg0: i32, %arg1: memref<8xi32, #tpu.memory_space<smem>>) -> (i32, i32) {
    %c0_i32 = arith.constant 0 : i32
    %c0_i32_0 = arith.constant 0 : i32
    %c0_i32_1 = arith.constant 0 : i32
    return %c0_i32, %c0_i32_0 : i32, i32
  }
  func.func @transform_2(%arg0: i32, %arg1: memref<8xi32, #tpu.memory_space<smem>>) -> (i32, i32) {
    %c0_i32 = arith.constant 0 : i32
    %c0_i32_0 = arith.constant 0 : i32
    %c0_i32_1 = arith.constant 0 : i32
    return %c0_i32, %c0_i32_0 : i32, i32
  }
  func.func @transform_3(%arg0: i32, %arg1: memref<8xi32, #tpu.memory_space<smem>>) -> (i32, i32) {
    %c0_i32 = arith.constant 0 : i32
    %c0_i32_0 = arith.constant 0 : i32
    %c0_i32_1 = arith.constant 0 : i32
    return %c0_i32, %c0_i32_0 : i32, i32
  }
  func.func @transform_4(%arg0: i32, %arg1: memref<8xi32, #tpu.memory_space<smem>>) -> (i32, i32) {
    %c0_i32 = arith.constant 0 : i32
    %c0_i32_0 = arith.constant 0 : i32
    %c0_i32_1 = arith.constant 0 : i32
    return %c0_i32, %c0_i32_0 : i32, i32
  }
  func.func @transform_5(%arg0: i32, %arg1: memref<8xi32, #tpu.memory_space<smem>>) -> (i32, i32) {
    %c0_i32 = arith.constant 0 : i32
    %c0_i32_0 = arith.constant 0 : i32
    return %arg0, %c0_i32 : i32, i32
  }
  func.func @transform_6(%arg0: i32, %arg1: memref<8xi32, #tpu.memory_space<smem>>) -> (i32, i32) {
    %c0_i32 = arith.constant 0 : i32
    %c0_i32_0 = arith.constant 0 : i32
    return %arg0, %c0_i32 : i32, i32
  }
}

</mosaic_0001>

<llo_original>
// kernel: fused_forward_arc.1
$region0: #{fused_forward_arc.1}
  #allocation0 [shape = 'u32[]', space=smem, size = 0x4, offset = 0x4, fixed_abs, tag = 'smem constant byte address 0x4 - core index']
  #allocation1 [shape = 'u32[144,128]{1,0:T(1,128)}', space=vmem, size = 0x12000, scoped, tag = 'internal scratch']
  #allocation2 [shape = 's32[1]{0}', space=sflag, size = 0x4, scoped, tag = 'scoped memory for fused_forward_arc.1']
  #allocation3 [shape = 'u8[512]{0}', space=smem, size = 0x200, scoped, tag = 'prefetched SMEM operand 0']
  %s0 = inlined_call_operand.vmem [shape: s32[8], index: 0, kind: input, shape index: {}]
  %s1 = inlined_call_operand.vmem [shape: bf16[8,64,128], index: 1, kind: input, shape index: {}]
  %s2 = inlined_call_operand.vmem [shape: bf16[128,128], index: 2, kind: input, shape index: {}]
  %s3 = inlined_call_operand.vmem [shape: bf16[128,128], index: 3, kind: input, shape index: {}]
  %s4 = inlined_call_operand.vmem [shape: f32[8,128], index: 4, kind: input, shape index: {}]
  %s5 = inlined_call_operand.vmem [shape: bf16[128,128], index: 5, kind: input, shape index: {}]
  %s6 = inlined_call_operand.vmem [shape: f32[8,128], index: 6, kind: output, shape index: {0}]
  %s7 = inlined_call_operand.vmem [shape: f32[8,128], index: 7, kind: output, shape index: {1}]
  %8 = xla_tuple %s6, %s7
  %s9 = sld [smem:[#allocation0]]
  $region38: #{fused_forward_arc.1} parent=0
    _
  %s11 = ssub.s32 1, %s9
  %s12 = scalar_select 0, %s11, %s9
  %s13 = sshll.u32 %s0, 4
  %s14 = int_to_ptr.vmem [resolvable:$true] %s13
  %16 = dma.vmem_to_smem %s14, 16, [#allocation3], [#allocation2]
  %17 = dma.done [#allocation2], 16
  %18 = sfence
  // Predicated region
  $region2: #{fused_forward_arc.1} parent=0 // pred_check
    _
  $region3: #{fused_forward_arc.1} parent=0 // pred_check_branch
    %20 = sbr.rel (0) target = $region5
  $region4: #{fused_forward_arc.1} parent=0 // pred_region
    _
  $region5: #{fused_forward_arc.1} parent=0 // pred_fallthru
    _
  // Predicated region
  $region6: #{fused_forward_arc.1} parent=0 // pred_check
    _
  $region7: #{fused_forward_arc.1} parent=0 // pred_check_branch
    %22 = sbr.rel (0) target = $region9
  $region8: #{fused_forward_arc.1} parent=0 // pred_region
    _
  $region9: #{fused_forward_arc.1} parent=0 // pred_fallthru
    _
  // Predicated region
  $region10: #{fused_forward_arc.1} parent=0 // pred_check
    _
  $region11: #{fused_forward_arc.1} parent=0 // pred_check_branch
    %24 = sbr.rel (0) target = $region13
  $region12: #{fused_forward_arc.1} parent=0 // pred_region
    _
  $region13: #{fused_forward_arc.1} parent=0 // pred_fallthru
    _
  // Predicated region
  $region14: #{fused_forward_arc.1} parent=0 // pred_check
    _
  $region15: #{fused_forward_arc.1} parent=0 // pred_check_branch
    %26 = sbr.rel (0) target = $region17
  $region16: #{fused_forward_arc.1} parent=0 // pred_region
    _
  $region17: #{fused_forward_arc.1} parent=0 // pred_fallthru
    _
  // Predicated region
  $region18: #{fused_forward_arc.1} parent=0 // pred_check
    _
  $region19: #{fused_forward_arc.1} parent=0 // pred_check_branch
    %28 = sbr.rel (0) target = $region21
  $region20: #{fused_forward_arc.1} parent=0 // pred_region
    _
  $region21: #{fused_forward_arc.1} parent=0 // pred_fallthru
    _
  %v30 = vld [vmem:[%s2] sm:$0xf]
  %v31 = vld [vmem:[%s2 + $0x4] sm:$0xf]
  %v32 = vld [vmem:[%s2 + $0x8] sm:$0xf]
  %v33 = vld [vmem:[%s2 + $0xc] sm:$0xf]
  %v34 = vld [vmem:[%s2 + $0x10] sm:$0xf]
  %v35 = vld [vmem:[%s2 + $0x14] sm:$0xf]
  %v36 = vld [vmem:[%s2 + $0x18] sm:$0xf]
  %v37 = vld [vmem:[%s2 + $0x1c] sm:$0xf]
  %v38 = vld [vmem:[%s2 + $0x20] sm:$0xf]
  %v39 = vld [vmem:[%s2 + $0x24] sm:$0xf]
  %v40 = vld [vmem:[%s2 + $0x28] sm:$0xf]
  %v41 = vld [vmem:[%s2 + $0x2c] sm:$0xf]
  %v42 = vld [vmem:[%s2 + $0x30] sm:$0xf]
  %v43 = vld [vmem:[%s2 + $0x34] sm:$0xf]
  %v44 = vld [vmem:[%s2 + $0x38] sm:$0xf]
  %v45 = vld [vmem:[%s2 + $0x3c] sm:$0xf]
  %v46 = vld [vmem:[%s1] sm:$0xf]
  %v47 = vld [vmem:[%s1 + $0x4] sm:$0xf]
  %v48 = vld [vmem:[%s1 + $0x8] sm:$0xf]
  %v49 = vld [vmem:[%s1 + $0xc] sm:$0xf]
  %v50 = vld [vmem:[%s1 + $0x20] sm:$0xf]
  %v51 = vld [vmem:[%s1 + $0x24] sm:$0xf]
  %v52 = vld [vmem:[%s1 + $0x28] sm:$0xf]
  %v53 = vld [vmem:[%s1 + $0x2c] sm:$0xf]
  %v54 = vld [vmem:[%s1 + $0x40] sm:$0xf]
  %v55 = vld [vmem:[%s1 + $0x44] sm:$0xf]
  %v56 = vld [vmem:[%s1 + $0x48] sm:$0xf]
  %v57 = vld [vmem:[%s1 + $0x4c] sm:$0xf]
  %v58 = vld [vmem:[%s1 + $0x60] sm:$0xf]
  %v59 = vld [vmem:[%s1 + $0x64] sm:$0xf]
  %v60 = vld [vmem:[%s1 + $0x68] sm:$0xf]
  %v61 = vld [vmem:[%s1 + $0x6c] sm:$0xf]
  %v62 = vld [vmem:[%s1 + $0x80] sm:$0xf]
  %v63 = vld [vmem:[%s1 + $0x84] sm:$0xf]
  %v64 = vld [vmem:[%s1 + $0x88] sm:$0xf]
  %v65 = vld [vmem:[%s1 + $0x8c] sm:$0xf]
  %v66 = vld [vmem:[%s1 + $0xa0] sm:$0xf]
  %v67 = vld [vmem:[%s1 + $0xa4] sm:$0xf]
  %v68 = vld [vmem:[%s1 + $0xa8] sm:$0xf]
  %v69 = vld [vmem:[%s1 + $0xac] sm:$0xf]
  %v70 = vld [vmem:[%s1 + $0xc0] sm:$0xf]
  %v71 = vld [vmem:[%s1 + $0xc4] sm:$0xf]
  %v72 = vld [vmem:[%s1 + $0xc8] sm:$0xf]
  %v73 = vld [vmem:[%s1 + $0xcc] sm:$0xf]
  %v74 = vld [vmem:[%s1 + $0xe0] sm:$0xf]
  %v75 = vld [vmem:[%s1 + $0xe4] sm:$0xf]
  %v76 = vld [vmem:[%s1 + $0xe8] sm:$0xf]
  %v77 = vld [vmem:[%s1 + $0xec] sm:$0xf]
  %v110 = vunpack.c.l.b16 %v46
  %v111 = vunpack.c.l.b16 %v47
  %v112 = vunpack.c.l.b16 %v48
  %v113 = vunpack.c.l.b16 %v49
  %v114 = vunpack.c.l.b16 %v50
  %v115 = vunpack.c.l.b16 %v51
  %v116 = vunpack.c.l.b16 %v52
  %v117 = vunpack.c.l.b16 %v53
  %v118 = vunpack.c.l.b16 %v54
  %v119 = vunpack.c.l.b16 %v55
  %v120 = vunpack.c.l.b16 %v56
  %v121 = vunpack.c.l.b16 %v57
  %v122 = vunpack.c.l.b16 %v58
  %v123 = vunpack.c.l.b16 %v59
  %v124 = vunpack.c.l.b16 %v60
  %v125 = vunpack.c.l.b16 %v61
  %v126 = vunpack.c.l.b16 %v62
  %v127 = vunpack.c.l.b16 %v63
  %v128 = vunpack.c.l.b16 %v64
  %v129 = vunpack.c.l.b16 %v65
  %v130 = vunpack.c.l.b16 %v66
  %v131 = vunpack.c.l.b16 %v67
  %v132 = vunpack.c.l.b16 %v68
  %v133 = vunpack.c.l.b16 %v69
  %v134 = vunpack.c.l.b16 %v70
  %v135 = vunpack.c.l.b16 %v71
  %v136 = vunpack.c.l.b16 %v72
  %v137 = vunpack.c.l.b16 %v73
  %v138 = vunpack.c.l.b16 %v74
  %v139 = vunpack.c.l.b16 %v75
  %v140 = vunpack.c.l.b16 %v76
  %v141 = vunpack.c.l.b16 %v77
  %v142 = vpack.c.b16 %v111, %v110
  %v143 = vpack.c.b16 %v113, %v112
  %v144 = vpack.c.b16 %v115, %v114
  %v145 = vpack.c.b16 %v117, %v116
  %v146 = vpack.c.b16 %v119, %v118
  %v147 = vpack.c.b16 %v121, %v120
  %v148 = vpack.c.b16 %v123, %v122
  %v149 = vpack.c.b16 %v125, %v124
  %v150 = vpack.c.b16 %v127, %v126
  %v151 = vpack.c.b16 %v129, %v128
  %v152 = vpack.c.b16 %v131, %v130
  %v153 = vpack.c.b16 %v133, %v132
  %v154 = vpack.c.b16 %v135, %v134
  %v155 = vpack.c.b16 %v137, %v136
  %v156 = vpack.c.b16 %v139, %v138
  %v157 = vpack.c.b16 %v141, %v140
  %v190 = vunpack.c.l.b16 %v30
  %v191 = vunpack.c.l.b16 %v31
  %v192 = vunpack.c.l.b16 %v32
  %v193 = vunpack.c.l.b16 %v33
  %v194 = vunpack.c.l.b16 %v34
  %v195 = vunpack.c.l.b16 %v35
  %v196 = vunpack.c.l.b16 %v36
  %v197 = vunpack.c.l.b16 %v37
  %v198 = vunpack.c.l.b16 %v38
  %v199 = vunpack.c.l.b16 %v39
  %v200 = vunpack.c.l.b16 %v40
  %v201 = vunpack.c.l.b16 %v41
  %v202 = vunpack.c.l.b16 %v42
  %v203 = vunpack.c.l.b16 %v43
  %v204 = vunpack.c.l.b16 %v44
  %v205 = vunpack.c.l.b16 %v45
  %v206 = vpack.c.b16 %v191, %v190
  %v207 = vpack.c.b16 %v193, %v192
  %v208 = vpack.c.b16 %v195, %v194
  %v209 = vpack.c.b16 %v197, %v196
  %v210 = vpack.c.b16 %v199, %v198
  %v211 = vpack.c.b16 %v201, %v200
  %v212 = vpack.c.b16 %v203, %v202
  %v213 = vpack.c.b16 %v205, %v204
  %222 = vmatprep.subr.bf16.mxu0 0
  %223 = vmatpush1.bf16.msra.mxu0 %v213
  %224 = vmatprep.subr.bf16.mxu0 0
  %225 = vmatpush1.bf16.msra.mxu0 %v212
  %226 = vmatprep.subr.bf16.mxu0 0
  %227 = vmatpush1.bf16.msra.mxu0 %v211
  %228 = vmatprep.subr.bf16.mxu0 0
  %229 = vmatpush1.bf16.msra.mxu0 %v210
  %230 = vmatprep.subr.bf16.mxu0 0
  %231 = vmatpush1.bf16.msra.mxu0 %v209
  %232 = vmatprep.subr.bf16.mxu0 0
  %233 = vmatpush1.bf16.msra.mxu0 %v208
  %234 = vmatprep.subr.bf16.mxu0 0
  %235 = vmatpush1.bf16.msra.mxu0 %v207
  %236 = vmatprep.subr.bf16.mxu0 0
  %237 = vmatpush1.bf16.msra.mxu0 %v206
  %238 = vmatprep.subr.bf16.mxu0 0
  %239 = vmatpush2.bf16.msra.mxu0 0
  %240 = vmatprep.subr.bf16.mxu0 0
  %241 = vmatpush2.bf16.msra.mxu0 0
  %242 = vmatprep.subr.bf16.mxu0 0
  %243 = vmatpush2.bf16.msra.mxu0 0
  %244 = vmatprep.subr.bf16.mxu0 0
  %245 = vmatpush2.bf16.msra.mxu0 0
  %246 = vmatprep.subr.bf16.mxu0 0
  %247 = vmatpush2.bf16.msra.mxu0 0
  %248 = vmatprep.subr.bf16.mxu0 0
  %249 = vmatpush2.bf16.msra.mxu0 0
  %250 = vmatprep.subr.bf16.mxu0 0
  %251 = vmatpush2.bf16.msra.mxu0 0
  %252 = vmatprep.subr.bf16.mxu0 0
  %253 = vmatpush2.bf16.msra.mxu0 0
  %254 = vmatprep.mubr.bf16.mxu0 0
  %255 = vmatmul.mubr.bf16.gmra.mxu0 %v142
  %v256 = vpop.f32.mrf.mxu0
  %v257 = vadd.f32 0.0, %v256
  %v258 = vpop.f32.mrf.mxu0
  %v259 = vpop.f32.mrf.mxu0
  %v260 = vadd.f32 0.0, %v259
  %v261 = vpop.f32.mrf.mxu0
  %262 = vmatprep.mubr.bf16.mxu0 0
  %263 = vmatmul.mubr.bf16.gmra.mxu0 %v143
  %v264 = vpop.f32.mrf.mxu0
  %v265 = vadd.f32 0.0, %v264
  %v266 = vpop.f32.mrf.mxu0
  %v267 = vpop.f32.mrf.mxu0
  %v268 = vadd.f32 0.0, %v267
  %v269 = vpop.f32.mrf.mxu0
  %270 = vmatprep.mubr.bf16.mxu0 0
  %271 = vmatmul.mubr.bf16.gmra.mxu0 %v144
  %v272 = vpop.f32.mrf.mxu0
  %v273 = vadd.f32 0.0, %v272
  %v274 = vpop.f32.mrf.mxu0
  %v275 = vpop.f32.mrf.mxu0
  %v276 = vadd.f32 0.0, %v275
  %v277 = vpop.f32.mrf.mxu0
  %278 = vmatprep.mubr.bf16.mxu0 0
  %279 = vmatmul.mubr.bf16.gmra.mxu0 %v145
  %v280 = vpop.f32.mrf.mxu0
  %v281 = vadd.f32 0.0, %v280
  %v282 = vpop.f32.mrf.mxu0
  %v283 = vpop.f32.mrf.mxu0
  %v284 = vadd.f32 0.0, %v283
  %v285 = vpop.f32.mrf.mxu0
  %286 = vmatprep.mubr.bf16.mxu0 0
  %287 = vmatmul.mubr.bf16.gmra.mxu0 %v146
  %v288 = vpop.f32.mrf.mxu0
  %v289 = vadd.f32 0.0, %v288
  %v290 = vpop.f32.mrf.mxu0
  %v291 = vpop.f32.mrf.mxu0
  %v292 = vadd.f32 0.0, %v291
  %v293 = vpop.f32.mrf.mxu0
  %294 = vmatprep.mubr.bf16.mxu0 0
  %295 = vmatmul.mubr.bf16.gmra.mxu0 %v147
  %v296 = vpop.f32.mrf.mxu0
  %v297 = vadd.f32 0.0, %v296
  %v298 = vpop.f32.mrf.mxu0
  %v299 = vpop.f32.mrf.mxu0
  %v300 = vadd.f32 0.0, %v299
  %v301 = vpop.f32.mrf.mxu0
  %302 = vmatprep.mubr.bf16.mxu0 0
  %303 = vmatmul.mubr.bf16.gmra.mxu0 %v148
  %v304 = vpop.f32.mrf.mxu0
  %v305 = vadd.f32 0.0, %v304
  %v306 = vpop.f32.mrf.mxu0
  %v307 = vpop.f32.mrf.mxu0
  %v308 = vadd.f32 0.0, %v307
  %v309 = vpop.f32.mrf.mxu0
  %310 = vmatprep.mubr.bf16.mxu0 0
  %311 = vmatmul.mubr.bf16.gmra.mxu0 %v149
  %v312 = vpop.f32.mrf.mxu0
  %v313 = vadd.f32 0.0, %v312
  %v314 = vpop.f32.mrf.mxu0
  %v315 = vpop.f32.mrf.mxu0
  %v316 = vadd.f32 0.0, %v315
  %v317 = vpop.f32.mrf.mxu0
  %318 = vmatprep.mubr.bf16.mxu0 0
  %319 = vmatmul.mubr.bf16.gmra.mxu0 %v150
  %v320 = vpop.f32.mrf.mxu0
  %v321 = vadd.f32 0.0, %v320
  %v322 = vpop.f32.mrf.mxu0
  %v323 = vpop.f32.mrf.mxu0
  %v324 = vadd.f32 0.0, %v323
  %v325 = vpop.f32.mrf.mxu0
  %326 = vmatprep.mubr.bf16.mxu0 0
  %327 = vmatmul.mubr.bf16.gmra.mxu0 %v151
  %v328 = vpop.f32.mrf.mxu0
  %v329 = vadd.f32 0.0, %v328
  %v330 = vpop.f32.mrf.mxu0
  %v331 = vpop.f32.mrf.mxu0
  %v332 = vadd.f32 0.0, %v331
  %v333 = vpop.f32.mrf.mxu0
  %334 = vmatprep.mubr.bf16.mxu0 0
  %335 = vmatmul.mubr.bf16.gmra.mxu0 %v152
  %v336 = vpop.f32.mrf.mxu0
  %v337 = vadd.f32 0.0, %v336
  %v338 = vpop.f32.mrf.mxu0
  %v339 = vpop.f32.mrf.mxu0
  %v340 = vadd.f32 0.0, %v339
  %v341 = vpop.f32.mrf.mxu0
  %342 = vmatprep.mubr.bf16.mxu0 0
  %343 = vmatmul.mubr.bf16.gmra.mxu0 %v153
  %v344 = vpop.f32.mrf.mxu0
  %v345 = vadd.f32 0.0, %v344
  %v346 = vpop.f32.mrf.mxu0
  %v347 = vpop.f32.mrf.mxu0
  %v348 = vadd.f32 0.0, %v347
  %v349 = vpop.f32.mrf.mxu0
  %350 = vmatprep.mubr.bf16.mxu0 0
  %351 = vmatmul.mubr.bf16.gmra.mxu0 %v154
  %v352 = vpop.f32.mrf.mxu0
  %v353 = vadd.f32 0.0, %v352
  %v354 = vpop.f32.mrf.mxu0
  %v355 = vpop.f32.mrf.mxu0
  %v356 = vadd.f32 0.0, %v355
  %v357 = vpop.f32.mrf.mxu0
  %358 = vmatprep.mubr.bf16.mxu0 0
  %359 = vmatmul.mubr.bf16.gmra.mxu0 %v155
  %v360 = vpop.f32.mrf.mxu0
  %v361 = vadd.f32 0.0, %v360
  %v362 = vpop.f32.mrf.mxu0
  %v363 = vpop.f32.mrf.mxu0
  %v364 = vadd.f32 0.0, %v363
  %v365 = vpop.f32.mrf.mxu0
  %366 = vmatprep.mubr.bf16.mxu0 0
  %367 = vmatmul.mubr.bf16.gmra.mxu0 %v156
  %v368 = vpop.f32.mrf.mxu0
  %v369 = vadd.f32 0.0, %v368
  %v370 = vpop.f32.mrf.mxu0
  %v371 = vpop.f32.mrf.mxu0
  %v372 = vadd.f32 0.0, %v371
  %v373 = vpop.f32.mrf.mxu0
  %374 = vmatprep.mubr.bf16.mxu0 0
  %375 = vmatmul.mubr.bf16.gmra.mxu0 %v157
  %v376 = vpop.f32.mrf.mxu0
  %v377 = vadd.f32 0.0, %v376
  %v378 = vpop.f32.mrf.mxu0
  %v379 = vpop.f32.mrf.mxu0
  %v380 = vadd.f32 0.0, %v379
  %v381 = vpop.f32.mrf.mxu0
  %382 = vdwg.mxu0
  %v383 = vxor.u32 %v257, 2147483648
  %v384 = vxor.u32 %v260, 2147483648
  %v385 = vxor.u32 %v265, 2147483648
  %v386 = vxor.u32 %v268, 2147483648
  %v387 = vxor.u32 %v273, 2147483648
  %v388 = vxor.u32 %v276, 2147483648
  %v389 = vxor.u32 %v281, 2147483648
  %v390 = vxor.u32 %v284, 2147483648
  %v391 = vxor.u32 %v289, 2147483648
  %v392 = vxor.u32 %v292, 2147483648
  %v393 = vxor.u32 %v297, 2147483648
  %v394 = vxor.u32 %v300, 2147483648
  %v395 = vxor.u32 %v305, 2147483648
  %v396 = vxor.u32 %v308, 2147483648
  %v397 = vxor.u32 %v313, 2147483648
  %v398 = vxor.u32 %v316, 2147483648
  %v399 = vxor.u32 %v321, 2147483648
  %v400 = vxor.u32 %v324, 2147483648
  %v401 = vxor.u32 %v329, 2147483648
  %v402 = vxor.u32 %v332, 2147483648
  %v403 = vxor.u32 %v337, 2147483648
  %v404 = vxor.u32 %v340, 2147483648
  %v405 = vxor.u32 %v345, 2147483648
  %v406 = vxor.u32 %v348, 2147483648
  %v407 = vxor.u32 %v353, 2147483648
  %v408 = vxor.u32 %v356, 2147483648
  %v409 = vxor.u32 %v361, 2147483648
  %v410 = vxor.u32 %v364, 2147483648
  %v411 = vxor.u32 %v369, 2147483648
  %v412 = vxor.u32 %v372, 2147483648
  %v413 = vxor.u32 %v377, 2147483648
  %v414 = vxor.u32 %v380, 2147483648
  %v415 = vmul.f32 %v383, 1.442695
  %v416 = vpow.pop %v415
  %v417 = vmul.f32 %v384, 1.442695
  %v418 = vpow.pop %v417
  %v419 = vmul.f32 %v385, 1.442695
  %v420 = vpow.pop %v419
  %v421 = vmul.f32 %v386, 1.442695
  %v422 = vpow.pop %v421
  %v423 = vmul.f32 %v387, 1.442695
  %v424 = vpow.pop %v423
  %v425 = vmul.f32 %v388, 1.442695
  %v426 = vpow.pop %v425
  %v427 = vmul.f32 %v389, 1.442695
  %v428 = vpow.pop %v427
  %v429 = vmul.f32 %v390, 1.442695
  %v430 = vpow.pop %v429
  %v431 = vmul.f32 %v391, 1.442695
  %v432 = vpow.pop %v431
  %v433 = vmul.f32 %v392, 1.442695
  %v434 = vpow.pop %v433
  %v435 = vmul.f32 %v393, 1.442695
  %v436 = vpow.pop %v435
  %v437 = vmul.f32 %v394, 1.442695
  %v438 = vpow.pop %v437
  %v439 = vmul.f32 %v395, 1.442695
  %v440 = vpow.pop %v439
  %v441 = vmul.f32 %v396, 1.442695
  %v442 = vpow.pop %v441
  %v443 = vmul.f32 %v397, 1.442695
  %v444 = vpow.pop %v443
  %v445 = vmul.f32 %v398, 1.442695
  %v446 = vpow.pop %v445
  %v447 = vmul.f32 %v399, 1.442695
  %v448 = vpow.pop %v447
  %v449 = vmul.f32 %v400, 1.442695
  %v450 = vpow.pop %v449
  %v451 = vmul.f32 %v401, 1.442695
  %v452 = vpow.pop %v451
  %v453 = vmul.f32 %v402, 1.442695
  %v454 = vpow.pop %v453
  %v455 = vmul.f32 %v403, 1.442695
  %v456 = vpow.pop %v455
  %v457 = vmul.f32 %v404, 1.442695
  %v458 = vpow.pop %v457
  %v459 = vmul.f32 %v405, 1.442695
  %v460 = vpow.pop %v459
  %v461 = vmul.f32 %v406, 1.442695
  %v462 = vpow.pop %v461
  %v463 = vmul.f32 %v407, 1.442695
  %v464 = vpow.pop %v463
  %v465 = vmul.f32 %v408, 1.442695
  %v466 = vpow.pop %v465
  %v467 = vmul.f32 %v409, 1.442695
  %v468 = vpow.pop %v467
  %v469 = vmul.f32 %v410, 1.442695
  %v470 = vpow.pop %v469
  %v471 = vmul.f32 %v411, 1.442695
  %v472 = vpow.pop %v471
  %v473 = vmul.f32 %v412, 1.442695
  %v474 = vpow.pop %v473
  %v475 = vmul.f32 %v413, 1.442695
  %v476 = vpow.pop %v475
  %v477 = vmul.f32 %v414, 1.442695
  %v478 = vpow.pop %v477
  %v479 = vadd.f32 %v416, 1.0
  %v480 = vadd.f32 %v418, 1.0
  %v481 = vadd.f32 %v420, 1.0
  %v482 = vadd.f32 %v422, 1.0
  %v483 = vadd.f32 %v424, 1.0
  %v484 = vadd.f32 %v426, 1.0
  %v485 = vadd.f32 %v428, 1.0
  %v486 = vadd.f32 %v430, 1.0
  %v487 = vadd.f32 %v432, 1.0
  %v488 = vadd.f32 %v434, 1.0
  %v489 = vadd.f32 %v436, 1.0
  %v490 = vadd.f32 %v438, 1.0
  %v491 = vadd.f32 %v440, 1.0
  %v492 = vadd.f32 %v442, 1.0
  %v493 = vadd.f32 %v444, 1.0
  %v494 = vadd.f32 %v446, 1.0
  %v495 = vadd.f32 %v448, 1.0
  %v496 = vadd.f32 %v450, 1.0
  %v497 = vadd.f32 %v452, 1.0
  %v498 = vadd.f32 %v454, 1.0
  %v499 = vadd.f32 %v456, 1.0
  %v500 = vadd.f32 %v458, 1.0
  %v501 = vadd.f32 %v460, 1.0
  %v502 = vadd.f32 %v462, 1.0
  %v503 = vadd.f32 %v464, 1.0
  %v504 = vadd.f32 %v466, 1.0
  %v505 = vadd.f32 %v468, 1.0
  %v506 = vadd.f32 %v470, 1.0
  %v507 = vadd.f32 %v472, 1.0
  %v508 = vadd.f32 %v474, 1.0
  %v509 = vadd.f32 %v476, 1.0
  %v510 = vadd.f32 %v478, 1.0
  %v511 = vrcp.pop %v479
  %v512 = vmul.f32 1.0, %v511
  %v513 = vrcp.pop %v480
  %v514 = vmul.f32 1.0, %v513
  %v515 = vrcp.pop %v481
  %v516 = vmul.f32 1.0, %v515
  %v517 = vrcp.pop %v482
  %v518 = vmul.f32 1.0, %v517
  %v519 = vrcp.pop %v483
  %v520 = vmul.f32 1.0, %v519
  %v521 = vrcp.pop %v484
  %v522 = vmul.f32 1.0, %v521
  %v523 = vrcp.pop %v485
  %v524 = vmul.f32 1.0, %v523
  %v525 = vrcp.pop %v486
  %v526 = vmul.f32 1.0, %v525
  %v527 = vrcp.pop %v487
  %v528 = vmul.f32 1.0, %v527
  %v529 = vrcp.pop %v488
  %v530 = vmul.f32 1.0, %v529
  %v531 = vrcp.pop %v489
  %v532 = vmul.f32 1.0, %v531
  %v533 = vrcp.pop %v490
  %v534 = vmul.f32 1.0, %v533
  %v535 = vrcp.pop %v491
  %v536 = vmul.f32 1.0, %v535
  %v537 = vrcp.pop %v492
  %v538 = vmul.f32 1.0, %v537
  %v539 = vrcp.pop %v493
  %v540 = vmul.f32 1.0, %v539
  %v541 = vrcp.pop %v494
  %v542 = vmul.f32 1.0, %v541
  %v543 = vrcp.pop %v495
  %v544 = vmul.f32 1.0, %v543
  %v545 = vrcp.pop %v496
  %v546 = vmul.f32 1.0, %v545
  %v547 = vrcp.pop %v497
  %v548 = vmul.f32 1.0, %v547
  %v549 = vrcp.pop %v498
  %v550 = vmul.f32 1.0, %v549
  %v551 = vrcp.pop %v499
  %v552 = vmul.f32 1.0, %v551
  %v553 = vrcp.pop %v500
  %v554 = vmul.f32 1.0, %v553
  %v555 = vrcp.pop %v501
  %v556 = vmul.f32 1.0, %v555
  %v557 = vrcp.pop %v502
  %v558 = vmul.f32 1.0, %v557
  %v559 = vrcp.pop %v503
  %v560 = vmul.f32 1.0, %v559
  %v561 = vrcp.pop %v504
  %v562 = vmul.f32 1.0, %v561
  %v563 = vrcp.pop %v505
  %v564 = vmul.f32 1.0, %v563
  %v565 = vrcp.pop %v506
  %v566 = vmul.f32 1.0, %v565
  %v567 = vrcp.pop %v507
  %v568 = vmul.f32 1.0, %v567
  %v569 = vrcp.pop %v508
  %v570 = vmul.f32 1.0, %v569
  %v571 = vrcp.pop %v509
  %v572 = vmul.f32 1.0, %v571
  %v573 = vrcp.pop %v510
  %v574 = vmul.f32 1.0, %v573
  %v575 = vmul.f32 %v257, %v512
  %v576 = vmul.f32 %v260, %v514
  %v577 = vmul.f32 %v265, %v516
  %v578 = vmul.f32 %v268, %v518
  %v579 = vmul.f32 %v273, %v520
  %v580 = vmul.f32 %v276, %v522
  %v581 = vmul.f32 %v281, %v524
  %v582 = vmul.f32 %v284, %v526
  %v583 = vmul.f32 %v289, %v528
  %v584 = vmul.f32 %v292, %v530
  %v585 = vmul.f32 %v297, %v532
  %v586 = vmul.f32 %v300, %v534
  %v587 = vmul.f32 %v305, %v536
  %v588 = vmul.f32 %v308, %v538
  %v589 = vmul.f32 %v313, %v540
  %v590 = vmul.f32 %v316, %v542
  %v591 = vmul.f32 %v321, %v544
  %v592 = vmul.f32 %v324, %v546
  %v593 = vmul.f32 %v329, %v548
  %v594 = vmul.f32 %v332, %v550
  %v595 = vmul.f32 %v337, %v552
  %v596 = vmul.f32 %v340, %v554
  %v597 = vmul.f32 %v345, %v556
  %v598 = vmul.f32 %v348, %v558
  %v599 = vmul.f32 %v353, %v560
  %v600 = vmul.f32 %v356, %v562
  %v601 = vmul.f32 %v361, %v564
  %v602 = vmul.f32 %v364, %v566
  %v603 = vmul.f32 %v369, %v568
  %v604 = vmul.f32 %v372, %v570
  %v605 = vmul.f32 %v377, %v572
  %v606 = vmul.f32 %v380, %v574
  %v607 = vadd.f32 %v575, %v576
  %v608 = vadd.f32 %v607, %v577
  %v609 = vadd.f32 %v608, %v578
  %v610 = vrot.slane %v609, 4
  %v611 = vadd.f32 %v609, %v610
  %v612 = vrot.slane %v611, 2
  %v613 = vadd.f32 %v611, %v612
  %v614 = vrot.slane %v613, 1
  %v615 = vadd.f32 %v613, %v614
  %v616 = vadd.f32 %v579, %v580
  %v617 = vadd.f32 %v616, %v581
  %v618 = vadd.f32 %v617, %v582
  %v619 = vrot.slane %v618, 4
  %v620 = vadd.f32 %v618, %v619
  %v621 = vrot.slane %v620, 2
  %v622 = vadd.f32 %v620, %v621
  %v623 = vrot.slane %v622, 1
  %v624 = vadd.f32 %v622, %v623
  %v625 = vadd.f32 %v583, %v584
  %v626 = vadd.f32 %v625, %v585
  %v627 = vadd.f32 %v626, %v586
  %v628 = vrot.slane %v627, 4
  %v629 = vadd.f32 %v627, %v628
  %v630 = vrot.slane %v629, 2
  %v631 = vadd.f32 %v629, %v630
  %v632 = vrot.slane %v631, 1
  %v633 = vadd.f32 %v631, %v632
  %v634 = vadd.f32 %v587, %v588
  %v635 = vadd.f32 %v634, %v589
  %v636 = vadd.f32 %v635, %v590
  %v637 = vrot.slane %v636, 4
  %v638 = vadd.f32 %v636, %v637
  %v639 = vrot.slane %v638, 2
  %v640 = vadd.f32 %v638, %v639
  %v641 = vrot.slane %v640, 1
  %v642 = vadd.f32 %v640, %v641
  %v643 = vadd.f32 %v591, %v592
  %v644 = vadd.f32 %v643, %v593
  %v645 = vadd.f32 %v644, %v594
  %v646 = vrot.slane %v645, 4
  %v647 = vadd.f32 %v645, %v646
  %v648 = vrot.slane %v647, 2
  %v649 = vadd.f32 %v647, %v648
  %v650 = vrot.slane %v649, 1
  %v651 = vadd.f32 %v649, %v650
  %v652 = vadd.f32 %v595, %v596
  %v653 = vadd.f32 %v652, %v597
  %v654 = vadd.f32 %v653, %v598
  %v655 = vrot.slane %v654, 4
  %v656 = vadd.f32 %v654, %v655
  %v657 = vrot.slane %v656, 2
  %v658 = vadd.f32 %v656, %v657
  %v659 = vrot.slane %v658, 1
  %v660 = vadd.f32 %v658, %v659
  %v661 = vadd.f32 %v599, %v600
  %v662 = vadd.f32 %v661, %v601
  %v663 = vadd.f32 %v662, %v602
  %v664 = vrot.slane %v663, 4
  %v665 = vadd.f32 %v663, %v664
  %v666 = vrot.slane %v665, 2
  %v667 = vadd.f32 %v665, %v666
  %v668 = vrot.slane %v667, 1
  %v669 = vadd.f32 %v667, %v668
  %v670 = vadd.f32 %v603, %v604
  %v671 = vadd.f32 %v670, %v605
  %v672 = vadd.f32 %v671, %v606
  %v673 = vrot.slane %v672, 4
  %v674 = vadd.f32 %v672, %v673
  %v675 = vrot.slane %v674, 2
  %v676 = vadd.f32 %v674, %v675
  %v677 = vrot.slane %v676, 1
  %v678 = vadd.f32 %v676, %v677
  %v679 = vadd.f32 %v615, 0.0
  %v680 = vadd.f32 %v624, 0.0
  %v681 = vadd.f32 %v633, 0.0
  %v682 = vadd.f32 %v642, 0.0
  %v683 = vadd.f32 %v651, 0.0
  %v684 = vadd.f32 %v660, 0.0
  %v685 = vadd.f32 %v669, 0.0
  %v686 = vadd.f32 %v678, 0.0
  %s687 = scalar_lea.vmem %s1, 16
  %v688 = vld [vmem:[%s687] sm:$0xf]
  %v689 = vld [vmem:[%s687 + $0x4] sm:$0xf]
  %v690 = vld [vmem:[%s687 + $0x8] sm:$0xf]
  %v691 = vld [vmem:[%s687 + $0xc] sm:$0xf]
  %v692 = vld [vmem:[%s687 + $0x20] sm:$0xf]
  %v693 = vld [vmem:[%s687 + $0x24] sm:$0xf]
  %v694 = vld [vmem:[%s687 + $0x28] sm:$0xf]
  %v695 = vld [vmem:[%s687 + $0x2c] sm:$0xf]
  %v696 = vld [vmem:[%s687 + $0x40] sm:$0xf]
  %v697 = vld [vmem:[%s687 + $0x44] sm:$0xf]
  %v698 = vld [vmem:[%s687 + $0x48] sm:$0xf]
  %v699 = vld [vmem:[%s687 + $0x4c] sm:$0xf]
  %v700 = vld [vmem:[%s687 + $0x60] sm:$0xf]
  %v701 = vld [vmem:[%s687 + $0x64] sm:$0xf]
  %v702 = vld [vmem:[%s687 + $0x68] sm:$0xf]
  %v703 = vld [vmem:[%s687 + $0x6c] sm:$0xf]
  %v704 = vld [vmem:[%s687 + $0x80] sm:$0xf]
  %v705 = vld [vmem:[%s687 + $0x84] sm:$0xf]
  %v706 = vld [vmem:[%s687 + $0x88] sm:$0xf]
  %v707 = vld [vmem:[%s687 + $0x8c] sm:$0xf]
  %v708 = vld [vmem:[%s687 + $0xa0] sm:$0xf]
  %v709 = vld [vmem:[%s687 + $0xa4] sm:$0xf]
  %v710 = vld [vmem:[%s687 + $0xa8] sm:$0xf]
  %v711 = vld [vmem:[%s687 + $0xac] sm:$0xf]
  %v712 = vld [vmem:[%s687 + $0xc0] sm:$0xf]
  %v713 = vld [vmem:[%s687 + $0xc4] sm:$0xf]
  %v714 = vld [vmem:[%s687 + $0xc8] sm:$0xf]
  %v715 = vld [vmem:[%s687 + $0xcc] sm:$0xf]
  %v716 = vld [vmem:[%s687 + $0xe0] sm:$0xf]
  %v717 = vld [vmem:[%s687 + $0xe4] sm:$0xf]
  %v718 = vld [vmem:[%s687 + $0xe8] sm:$0xf]
  %v719 = vld [vmem:[%s687 + $0xec] sm:$0xf]
  %v752 = vunpack.c.l.b16 %v688
  %v753 = vunpack.c.l.b16 %v689
  %v754 = vunpack.c.l.b16 %v690
  %v755 = vunpack.c.l.b16 %v691
  %v756 = vunpack.c.l.b16 %v692
  %v757 = vunpack.c.l.b16 %v693
  %v758 = vunpack.c.l.b16 %v694
  %v759 = vunpack.c.l.b16 %v695
  %v760 = vunpack.c.l.b16 %v696
  %v761 = vunpack.c.l.b16 %v697
  %v762 = vunpack.c.l.b16 %v698
  %v763 = vunpack.c.l.b16 %v699
  %v764 = vunpack.c.l.b16 %v700
  %v765 = vunpack.c.l.b16 %v701
  %v766 = vunpack.c.l.b16 %v702
  %v767 = vunpack.c.l.b16 %v703
  %v768 = vunpack.c.l.b16 %v704
  %v769 = vunpack.c.l.b16 %v705
  %v770 = vunpack.c.l.b16 %v706
  %v771 = vunpack.c.l.b16 %v707
  %v772 = vunpack.c.l.b16 %v708
  %v773 = vunpack.c.l.b16 %v709
  %v774 = vunpack.c.l.b16 %v710
  %v775 = vunpack.c.l.b16 %v711
  %v776 = vunpack.c.l.b16 %v712
  %v777 = vunpack.c.l.b16 %v713
  %v778 = vunpack.c.l.b16 %v714
  %v779 = vunpack.c.l.b16 %v715
  %v780 = vunpack.c.l.b16 %v716
  %v781 = vunpack.c.l.b16 %v717
  %v782 = vunpack.c.l.b16 %v718
  %v783 = vunpack.c.l.b16 %v719
  %v784 = vpack.c.b16 %v753, %v752
  %v785 = vpack.c.b16 %v755, %v754
  %v786 = vpack.c.b16 %v757, %v756
  %v787 = vpack.c.b16 %v759, %v758
  %v788 = vpack.c.b16 %v761, %v760
  %v789 = vpack.c.b16 %v763, %v762
  %v790 = vpack.c.b16 %v765, %v764
  %v791 = vpack.c.b16 %v767, %v766
  %v792 = vpack.c.b16 %v769, %v768
  %v793 = vpack.c.b16 %v771, %v770
  %v794 = vpack.c.b16 %v773, %v772
  %v795 = vpack.c.b16 %v775, %v774
  %v796 = vpack.c.b16 %v777, %v776
  %v797 = vpack.c.b16 %v779, %v778
  %v798 = vpack.c.b16 %v781, %v780
  %v799 = vpack.c.b16 %v783, %v782
  %816 = vmatprep.subr.bf16.mxu0 0
  %817 = vmatpush1.bf16.msra.mxu0 %v213
  %818 = vmatprep.subr.bf16.mxu0 0
  %819 = vmatpush1.bf16.msra.mxu0 %v212
  %820 = vmatprep.subr.bf16.mxu0 0
  %821 = vmatpush1.bf16.msra.mxu0 %v211
  %822 = vmatprep.subr.bf16.mxu0 0
  %823 = vmatpush1.bf16.msra.mxu0 %v210
  %824 = vmatprep.subr.bf16.mxu0 0
  %825 = vmatpush1.bf16.msra.mxu0 %v209
  %826 = vmatprep.subr.bf16.mxu0 0
  %827 = vmatpush1.bf16.msra.mxu0 %v208
  %828 = vmatprep.subr.bf16.mxu0 0
  %829 = vmatpush1.bf16.msra.mxu0 %v207
  %830 = vmatprep.subr.bf16.mxu0 0
  %831 = vmatpush1.bf16.msra.mxu0 %v206
  %832 = vmatprep.subr.bf16.mxu0 0
  %833 = vmatpush2.bf16.msra.mxu0 0
  %834 = vmatprep.subr.bf16.mxu0 0
  %835 = vmatpush2.bf16.msra.mxu0 0
  %836 = vmatprep.subr.bf16.mxu0 0
  %837 = vmatpush2.bf16.msra.mxu0 0
  %838 = vmatprep.subr.bf16.mxu0 0
  %839 = vmatpush2.bf16.msra.mxu0 0
  %840 = vmatprep.subr.bf16.mxu0 0
  %841 = vmatpush2.bf16.msra.mxu0 0
  %842 = vmatprep.subr.bf16.mxu0 0
  %843 = vmatpush2.bf16.msra.mxu0 0
  %844 = vmatprep.subr.bf16.mxu0 0
  %845 = vmatpush2.bf16.msra.mxu0 0
  %846 = vmatprep.subr.bf16.mxu0 0
  %847 = vmatpush2.bf16.msra.mxu0 0
  %848 = vmatprep.mubr.bf16.mxu0 0
  %849 = vmatmul.mubr.bf16.gmra.mxu0 %v784
  %v850 = vpop.f32.mrf.mxu0
  %v851 = vadd.f32 0.0, %v850
  %v852 = vpop.f32.mrf.mxu0
  %v853 = vpop.f32.mrf.mxu0
  %v854 = vadd.f32 0.0, %v853
  %v855 = vpop.f32.mrf.mxu0
  %856 = vmatprep.mubr.bf16.mxu0 0
  %857 = vmatmul.mubr.bf16.gmra.mxu0 %v785
  %v858 = vpop.f32.mrf.mxu0
  %v859 = vadd.f32 0.0, %v858
  %v860 = vpop.f32.mrf.mxu0
  %v861 = vpop.f32.mrf.mxu0
  %v862 = vadd.f32 0.0, %v861
  %v863 = vpop.f32.mrf.mxu0
  %864 = vmatprep.mubr.bf16.mxu0 0
  %865 = vmatmul.mubr.bf16.gmra.mxu0 %v786
  %v866 = vpop.f32.mrf.mxu0
  %v867 = vadd.f32 0.0, %v866
  %v868 = vpop.f32.mrf.mxu0
  %v869 = vpop.f32.mrf.mxu0
  %v870 = vadd.f32 0.0, %v869
  %v871 = vpop.f32.mrf.mxu0
  %872 = vmatprep.mubr.bf16.mxu0 0
  %873 = vmatmul.mubr.bf16.gmra.mxu0 %v787
  %v874 = vpop.f32.mrf.mxu0
  %v875 = vadd.f32 0.0, %v874
  %v876 = vpop.f32.mrf.mxu0
  %v877 = vpop.f32.mrf.mxu0
  %v878 = vadd.f32 0.0, %v877
  %v879 = vpop.f32.mrf.mxu0
  %880 = vmatprep.mubr.bf16.mxu0 0
  %881 = vmatmul.mubr.bf16.gmra.mxu0 %v788
  %v882 = vpop.f32.mrf.mxu0
  %v883 = vadd.f32 0.0, %v882
  %v884 = vpop.f32.mrf.mxu0
  %v885 = vpop.f32.mrf.mxu0
  %v886 = vadd.f32 0.0, %v885
  %v887 = vpop.f32.mrf.mxu0
  %888 = vmatprep.mubr.bf16.mxu0 0
  %889 = vmatmul.mubr.bf16.gmra.mxu0 %v789
  %v890 = vpop.f32.mrf.mxu0
  %v891 = vadd.f32 0.0, %v890
  %v892 = vpop.f32.mrf.mxu0
  %v893 = vpop.f32.mrf.mxu0
  %v894 = vadd.f32 0.0, %v893
  %v895 = vpop.f32.mrf.mxu0
  %896 = vmatprep.mubr.bf16.mxu0 0
  %897 = vmatmul.mubr.bf16.gmra.mxu0 %v790
  %v898 = vpop.f32.mrf.mxu0
  %v899 = vadd.f32 0.0, %v898
  %v900 = vpop.f32.mrf.mxu0
  %v901 = vpop.f32.mrf.mxu0
  %v902 = vadd.f32 0.0, %v901
  %v903 = vpop.f32.mrf.mxu0
  %904 = vmatprep.mubr.bf16.mxu0 0
  %905 = vmatmul.mubr.bf16.gmra.mxu0 %v791
  %v906 = vpop.f32.mrf.mxu0
  %v907 = vadd.f32 0.0, %v906
  %v908 = vpop.f32.mrf.mxu0
  %v909 = vpop.f32.mrf.mxu0
  %v910 = vadd.f32 0.0, %v909
  %v911 = vpop.f32.mrf.mxu0
  %912 = vmatprep.mubr.bf16.mxu0 0
  %913 = vmatmul.mubr.bf16.gmra.mxu0 %v792
  %v914 = vpop.f32.mrf.mxu0
  %v915 = vadd.f32 0.0, %v914
  %v916 = vpop.f32.mrf.mxu0
  %v917 = vpop.f32.mrf.mxu0
  %v918 = vadd.f32 0.0, %v917
  %v919 = vpop.f32.mrf.mxu0
  %920 = vmatprep.mubr.bf16.mxu0 0
  %921 = vmatmul.mubr.bf16.gmra.mxu0 %v793
  %v922 = vpop.f32.mrf.mxu0
  %v923 = vadd.f32 0.0, %v922
  %v924 = vpop.f32.mrf.mxu0
  %v925 = vpop.f32.mrf.mxu0
  %v926 = vadd.f32 0.0, %v925
  %v927 = vpop.f32.mrf.mxu0
  %928 = vmatprep.mubr.bf16.mxu0 0
  %929 = vmatmul.mubr.bf16.gmra.mxu0 %v794
  %v930 = vpop.f32.mrf.mxu0
  %v931 = vadd.f32 0.0, %v930
  %v932 = vpop.f32.mrf.mxu0
  %v933 = vpop.f32.mrf.mxu0
  %v934 = vadd.f32 0.0, %v933
  %v935 = vpop.f32.mrf.mxu0
  %936 = vmatprep.mubr.bf16.mxu0 0
  %937 = vmatmul.mubr.bf16.gmra.mxu0 %v795
  %v938 = vpop.f32.mrf.mxu0
  %v939 = vadd.f32 0.0, %v938
  %v940 = vpop.f32.mrf.mxu0
  %v941 = vpop.f32.mrf.mxu0
  %v942 = vadd.f32 0.0, %v941
  %v943 = vpop.f32.mrf.mxu0
  %944 = vmatprep.mubr.bf16.mxu0 0
  %945 = vmatmul.mubr.bf16.gmra.mxu0 %v796
  %v946 = vpop.f32.mrf.mxu0
  %v947 = vadd.f32 0.0, %v946
  %v948 = vpop.f32.mrf.mxu0
  %v949 = vpop.f32.mrf.mxu0
  %v950 = vadd.f32 0.0, %v949
  %v951 = vpop.f32.mrf.mxu0
  %952 = vmatprep.mubr.bf16.mxu0 0
  %953 = vmatmul.mubr.bf16.gmra.mxu0 %v797
  %v954 = vpop.f32.mrf.mxu0
  %v955 = vadd.f32 0.0, %v954
  %v956 = vpop.f32.mrf.mxu0
  %v957 = vpop.f32.mrf.mxu0
  %v958 = vadd.f32 0.0, %v957
  %v959 = vpop.f32.mrf.mxu0
  %960 = vmatprep.mubr.bf16.mxu0 0
  %961 = vmatmul.mubr.bf16.gmra.mxu0 %v798
  %v962 = vpop.f32.mrf.mxu0
  %v963 = vadd.f32 0.0, %v962
  %v964 = vpop.f32.mrf.mxu0
  %v965 = vpop.f32.mrf.mxu0
  %v966 = vadd.f32 0.0, %v965
  %v967 = vpop.f32.mrf.mxu0
  %968 = vmatprep.mubr.bf16.mxu0 0
  %969 = vmatmul.mubr.bf16.gmra.mxu0 %v799
  %v970 = vpop.f32.mrf.mxu0
  %v971 = vadd.f32 0.0, %v970
  %v972 = vpop.f32.mrf.mxu0
  %v973 = vpop.f32.mrf.mxu0
  %v974 = vadd.f32 0.0, %v973
  %v975 = vpop.f32.mrf.mxu0
  %976 = vdwg.mxu0
  %v977 = vxor.u32 %v851, 2147483648
  %v978 = vxor.u32 %v854, 2147483648
  %v979 = vxor.u32 %v859, 2147483648
  %v980 = vxor.u32 %v862, 2147483648
  %v981 = vxor.u32 %v867, 2147483648
  %v982 = vxor.u32 %v870, 2147483648
  %v983 = vxor.u32 %v875, 2147483648
  %v984 = vxor.u32 %v878, 2147483648
  %v985 = vxor.u32 %v883, 2147483648
  %v986 = vxor.u32 %v886, 2147483648
  %v987 = vxor.u32 %v891, 2147483648
  %v988 = vxor.u32 %v894, 2147483648
  %v989 = vxor.u32 %v899, 2147483648
  %v990 = vxor.u32 %v902, 2147483648
  %v991 = vxor.u32 %v907, 2147483648
  %v992 = vxor.u32 %v910, 2147483648
  %v993 = vxor.u32 %v915, 2147483648
  %v994 = vxor.u32 %v918, 2147483648
  %v995 = vxor.u32 %v923, 2147483648
  %v996 = vxor.u32 %v926, 2147483648
  %v997 = vxor.u32 %v931, 2147483648
  %v998 = vxor.u32 %v934, 2147483648
  %v999 = vxor.u32 %v939, 2147483648
  %v1000 = vxor.u32 %v942, 2147483648
  %v1001 = vxor.u32 %v947, 2147483648
  %v1002 = vxor.u32 %v950, 2147483648
  %v1003 = vxor.u32 %v955, 2147483648
  %v1004 = vxor.u32 %v958, 2147483648
  %v1005 = vxor.u32 %v963, 2147483648
  %v1006 = vxor.u32 %v966, 2147483648
  %v1007 = vxor.u32 %v971, 2147483648
  %v1008 = vxor.u32 %v974, 2147483648
  %v1009 = vmul.f32 %v977, 1.442695
  %v1010 = vpow.pop %v1009
  %v1011 = vmul.f32 %v978, 1.442695
  %v1012 = vpow.pop %v1011
  %v1013 = vmul.f32 %v979, 1.442695
  %v1014 = vpow.pop %v1013
  %v1015 = vmul.f32 %v980, 1.442695
  %v1016 = vpow.pop %v1015
  %v1017 = vmul.f32 %v981, 1.442695
  %v1018 = vpow.pop %v1017
  %v1019 = vmul.f32 %v982, 1.442695
  %v1020 = vpow.pop %v1019
  %v1021 = vmul.f32 %v983, 1.442695
  %v1022 = vpow.pop %v1021
  %v1023 = vmul.f32 %v984, 1.442695
  %v1024 = vpow.pop %v1023
  %v1025 = vmul.f32 %v985, 1.442695
  %v1026 = vpow.pop %v1025
  %v1027 = vmul.f32 %v986, 1.442695
  %v1028 = vpow.pop %v1027
  %v1029 = vmul.f32 %v987, 1.442695
  %v1030 = vpow.pop %v1029
  %v1031 = vmul.f32 %v988, 1.442695
  %v1032 = vpow.pop %v1031
  %v1033 = vmul.f32 %v989, 1.442695
  %v1034 = vpow.pop %v1033
  %v1035 = vmul.f32 %v990, 1.442695
  %v1036 = vpow.pop %v1035
  %v1037 = vmul.f32 %v991, 1.442695
  %v1038 = vpow.pop %v1037
  %v1039 = vmul.f32 %v992, 1.442695
  %v1040 = vpow.pop %v1039
  %v1041 = vmul.f32 %v993, 1.442695
  %v1042 = vpow.pop %v1041
  %v1043 = vmul.f32 %v994, 1.442695
  %v1044 = vpow.pop %v1043
  %v1045 = vmul.f32 %v995, 1.442695
  %v1046 = vpow.pop %v1045
  %v1047 = vmul.f32 %v996, 1.442695
  %v1048 = vpow.pop %v1047
  %v1049 = vmul.f32 %v997, 1.442695
  %v1050 = vpow.pop %v1049
  %v1051 = vmul.f32 %v998, 1.442695
  %v1052 = vpow.pop %v1051
  %v1053 = vmul.f32 %v999, 1.442695
  %v1054 = vpow.pop %v1053
  %v1055 = vmul.f32 %v1000, 1.442695
  %v1056 = vpow.pop %v1055
  %v1057 = vmul.f32 %v1001, 1.442695
  %v1058 = vpow.pop %v1057
  %v1059 = vmul.f32 %v1002, 1.442695
  %v1060 = vpow.pop %v1059
  %v1061 = vmul.f32 %v1003, 1.442695
  %v1062 = vpow.pop %v1061
  %v1063 = vmul.f32 %v1004, 1.442695
  %v1064 = vpow.pop %v1063
  %v1065 = vmul.f32 %v1005, 1.442695
  %v1066 = vpow.pop %v1065
  %v1067 = vmul.f32 %v1006, 1.442695
  %v1068 = vpow.pop %v1067
  %v1069 = vmul.f32 %v1007, 1.442695
  %v1070 = vpow.pop %v1069
  %v1071 = vmul.f32 %v1008, 1.442695
  %v1072 = vpow.pop %v1071
  %v1073 = vadd.f32 %v1010, 1.0
  %v1074 = vadd.f32 %v1012, 1.0
  %v1075 = vadd.f32 %v1014, 1.0
  %v1076 = vadd.f32 %v1016, 1.0
  %v1077 = vadd.f32 %v1018, 1.0
  %v1078 = vadd.f32 %v1020, 1.0
  %v1079 = vadd.f32 %v1022, 1.0
  %v1080 = vadd.f32 %v1024, 1.0
  %v1081 = vadd.f32 %v1026, 1.0
  %v1082 = vadd.f32 %v1028, 1.0
  %v1083 = vadd.f32 %v1030, 1.0
  %v1084 = vadd.f32 %v1032, 1.0
  %v1085 = vadd.f32 %v1034, 1.0
  %v1086 = vadd.f32 %v1036, 1.0
  %v1087 = vadd.f32 %v1038, 1.0
  %v1088 = vadd.f32 %v1040, 1.0
  %v1089 = vadd.f32 %v1042, 1.0
  %v1090 = vadd.f32 %v1044, 1.0
  %v1091 = vadd.f32 %v1046, 1.0
  %v1092 = vadd.f32 %v1048, 1.0
  %v1093 = vadd.f32 %v1050, 1.0
  %v1094 = vadd.f32 %v1052, 1.0
  %v1095 = vadd.f32 %v1054, 1.0
  %v1096 = vadd.f32 %v1056, 1.0
  %v1097 = vadd.f32 %v1058, 1.0
  %v1098 = vadd.f32 %v1060, 1.0
  %v1099 = vadd.f32 %v1062, 1.0
  %v1100 = vadd.f32 %v1064, 1.0
  %v1101 = vadd.f32 %v1066, 1.0
  %v1102 = vadd.f32 %v1068, 1.0
  %v1103 = vadd.f32 %v1070, 1.0
  %v1104 = vadd.f32 %v1072, 1.0
  %v1105 = vrcp.pop %v1073
  %v1106 = vmul.f32 1.0, %v1105
  %v1107 = vrcp.pop %v1074
  %v1108 = vmul.f32 1.0, %v1107
  %v1109 = vrcp.pop %v1075
  %v1110 = vmul.f32 1.0, %v1109
  %v1111 = vrcp.pop %v1076
  %v1112 = vmul.f32 1.0, %v1111
  %v1113 = vrcp.pop %v1077
  %v1114 = vmul.f32 1.0, %v1113
  %v1115 = vrcp.pop %v1078
  %v1116 = vmul.f32 1.0, %v1115
  %v1117 = vrcp.pop %v1079
  %v1118 = vmul.f32 1.0, %v1117
  %v1119 = vrcp.pop %v1080
  %v1120 = vmul.f32 1.0, %v1119
  %v1121 = vrcp.pop %v1081
  %v1122 = vmul.f32 1.0, %v1121
  %v1123 = vrcp.pop %v1082
  %v1124 = vmul.f32 1.0, %v1123
  %v1125 = vrcp.pop %v1083
  %v1126 = vmul.f32 1.0, %v1125
  %v1127 = vrcp.pop %v1084
  %v1128 = vmul.f32 1.0, %v1127
  %v1129 = vrcp.pop %v1085
  %v1130 = vmul.f32 1.0, %v1129
  %v1131 = vrcp.pop %v1086
  %v1132 = vmul.f32 1.0, %v1131
  %v1133 = vrcp.pop %v1087
  %v1134 = vmul.f32 1.0, %v1133
  %v1135 = vrcp.pop %v1088
  %v1136 = vmul.f32 1.0, %v1135
  %v1137 = vrcp.pop %v1089
  %v1138 = vmul.f32 1.0, %v1137
  %v1139 = vrcp.pop %v1090
  %v1140 = vmul.f32 1.0, %v1139
  %v1141 = vrcp.pop %v1091
  %v1142 = vmul.f32 1.0, %v1141
  %v1143 = vrcp.pop %v1092
  %v1144 = vmul.f32 1.0, %v1143
  %v1145 = vrcp.pop %v1093
  %v1146 = vmul.f32 1.0, %v1145
  %v1147 = vrcp.pop %v1094
  %v1148 = vmul.f32 1.0, %v1147
  %v1149 = vrcp.pop %v1095
  %v1150 = vmul.f32 1.0, %v1149
  %v1151 = vrcp.pop %v1096
  %v1152 = vmul.f32 1.0, %v1151
  %v1153 = vrcp.pop %v1097
  %v1154 = vmul.f32 1.0, %v1153
  %v1155 = vrcp.pop %v1098
  %v1156 = vmul.f32 1.0, %v1155
  %v1157 = vrcp.pop %v1099
  %v1158 = vmul.f32 1.0, %v1157
  %v1159 = vrcp.pop %v1100
  %v1160 = vmul.f32 1.0, %v1159
  %v1161 = vrcp.pop %v1101
  %v1162 = vmul.f32 1.0, %v1161
  %v1163 = vrcp.pop %v1102
  %v1164 = vmul.f32 1.0, %v1163
  %v1165 = vrcp.pop %v1103
  %v1166 = vmul.f32 1.0, %v1165
  %v1167 = vrcp.pop %v1104
  %v1168 = vmul.f32 1.0, %v1167
  %v1169 = vmul.f32 %v851, %v1106
  %v1170 = vmul.f32 %v854, %v1108
  %v1171 = vmul.f32 %v859, %v1110
  %v1172 = vmul.f32 %v862, %v1112
  %v1173 = vmul.f32 %v867, %v1114
  %v1174 = vmul.f32 %v870, %v1116
  %v1175 = vmul.f32 %v875, %v1118
  %v1176 = vmul.f32 %v878, %v1120
  %v1177 = vmul.f32 %v883, %v1122
  %v1178 = vmul.f32 %v886, %v1124
  %v1179 = vmul.f32 %v891, %v1126
  %v1180 = vmul.f32 %v894, %v1128
  %v1181 = vmul.f32 %v899, %v1130
  %v1182 = vmul.f32 %v902, %v1132
  %v1183 = vmul.f32 %v907, %v1134
  %v1184 = vmul.f32 %v910, %v1136
  %v1185 = vmul.f32 %v915, %v1138
  %v1186 = vmul.f32 %v918, %v1140
  %v1187 = vmul.f32 %v923, %v1142
  %v1188 = vmul.f32 %v926, %v1144
  %v1189 = vmul.f32 %v931, %v1146
  %v1190 = vmul.f32 %v934, %v1148
  %v1191 = vmul.f32 %v939, %v1150
  %v1192 = vmul.f32 %v942, %v1152
  %v1193 = vmul.f32 %v947, %v1154
  %v1194 = vmul.f32 %v950, %v1156
  %v1195 = vmul.f32 %v955, %v1158
  %v1196 = vmul.f32 %v958, %v1160
  %v1197 = vmul.f32 %v963, %v1162
  %v1198 = vmul.f32 %v966, %v1164
  %v1199 = vmul.f32 %v971, %v1166
  %v1200 = vmul.f32 %v974, %v1168
  %v1201 = vadd.f32 %v1169, %v1170
  %v1202 = vadd.f32 %v1201, %v1171
  %v1203 = vadd.f32 %v1202, %v1172
  %v1204 = vrot.slane %v1203, 4
  %v1205 = vadd.f32 %v1203, %v1204
  %v1206 = vrot.slane %v1205, 2
  %v1207 = vadd.f32 %v1205, %v1206
  %v1208 = vrot.slane %v1207, 1
  %v1209 = vadd.f32 %v1207, %v1208
  %v1210 = vadd.f32 %v1173, %v1174
  %v1211 = vadd.f32 %v1210, %v1175
  %v1212 = vadd.f32 %v1211, %v1176
  %v1213 = vrot.slane %v1212, 4
  %v1214 = vadd.f32 %v1212, %v1213
  %v1215 = vrot.slane %v1214, 2
  %v1216 = vadd.f32 %v1214, %v1215
  %v1217 = vrot.slane %v1216, 1
  %v1218 = vadd.f32 %v1216, %v1217
  %v1219 = vadd.f32 %v1177, %v1178
  %v1220 = vadd.f32 %v1219, %v1179
  %v1221 = vadd.f32 %v1220, %v1180
  %v1222 = vrot.slane %v1221, 4
  %v1223 = vadd.f32 %v1221, %v1222
  %v1224 = vrot.slane %v1223, 2
  %v1225 = vadd.f32 %v1223, %v1224
  %v1226 = vrot.slane %v1225, 1
  %v1227 = vadd.f32 %v1225, %v1226
  %v1228 = vadd.f32 %v1181, %v1182
  %v1229 = vadd.f32 %v1228, %v1183
  %v1230 = vadd.f32 %v1229, %v1184
  %v1231 = vrot.slane %v1230, 4
  %v1232 = vadd.f32 %v1230, %v1231
  %v1233 = vrot.slane %v1232, 2
  %v1234 = vadd.f32 %v1232, %v1233
  %v1235 = vrot.slane %v1234, 1
  %v1236 = vadd.f32 %v1234, %v1235
  %v1237 = vadd.f32 %v1185, %v1186
  %v1238 = vadd.f32 %v1237, %v1187
  %v1239 = vadd.f32 %v1238, %v1188
  %v1240 = vrot.slane %v1239, 4
  %v1241 = vadd.f32 %v1239, %v1240
  %v1242 = vrot.slane %v1241, 2
  %v1243 = vadd.f32 %v1241, %v1242
  %v1244 = vrot.slane %v1243, 1
  %v1245 = vadd.f32 %v1243, %v1244
  %v1246 = vadd.f32 %v1189, %v1190
  %v1247 = vadd.f32 %v1246, %v1191
  %v1248 = vadd.f32 %v1247, %v1192
  %v1249 = vrot.slane %v1248, 4
  %v1250 = vadd.f32 %v1248, %v1249
  %v1251 = vrot.slane %v1250, 2
  %v1252 = vadd.f32 %v1250, %v1251
  %v1253 = vrot.slane %v1252, 1
  %v1254 = vadd.f32 %v1252, %v1253
  %v1255 = vadd.f32 %v1193, %v1194
  %v1256 = vadd.f32 %v1255, %v1195
  %v1257 = vadd.f32 %v1256, %v1196
  %v1258 = vrot.slane %v1257, 4
  %v1259 = vadd.f32 %v1257, %v1258
  %v1260 = vrot.slane %v1259, 2
  %v1261 = vadd.f32 %v1259, %v1260
  %v1262 = vrot.slane %v1261, 1
  %v1263 = vadd.f32 %v1261, %v1262
  %v1264 = vadd.f32 %v1197, %v1198
  %v1265 = vadd.f32 %v1264, %v1199
  %v1266 = vadd.f32 %v1265, %v1200
  %v1267 = vrot.slane %v1266, 4
  %v1268 = vadd.f32 %v1266, %v1267
  %v1269 = vrot.slane %v1268, 2
  %v1270 = vadd.f32 %v1268, %v1269
  %v1271 = vrot.slane %v1270, 1
  %v1272 = vadd.f32 %v1270, %v1271
  %v1273 = vadd.f32 %v679, %v1209
  %v1274 = vadd.f32 %v680, %v1218
  %v1275 = vadd.f32 %v681, %v1227
  %v1276 = vadd.f32 %v682, %v1236
  %v1277 = vadd.f32 %v683, %v1245
  %v1278 = vadd.f32 %v684, %v1254
  %v1279 = vadd.f32 %v685, %v1263
  %v1280 = vadd.f32 %v686, %v1272
  %v1281 = vmul.f32 %v1273, 0.015625
  %v1282 = vmul.f32 %v1274, 0.015625
  %v1283 = vmul.f32 %v1275, 0.015625
  %v1284 = vmul.f32 %v1276, 0.015625
  %v1285 = vmul.f32 %v1277, 0.015625
  %v1286 = vmul.f32 %v1278, 0.015625
  %v1287 = vmul.f32 %v1279, 0.015625
  %v1288 = vmul.f32 %v1280, 0.015625
  %v1289 = vpack.c.bf16 %v1281, %v1281
  %v1290 = vpack.c.bf16 %v1282, %v1282
  %v1291 = vpack.c.bf16 %v1283, %v1283
  %v1292 = vpack.c.bf16 %v1284, %v1284
  %v1293 = vpack.c.bf16 %v1285, %v1285
  %v1294 = vpack.c.bf16 %v1286, %v1286
  %v1295 = vpack.c.bf16 %v1287, %v1287
  %v1296 = vpack.c.bf16 %v1288, %v1288
  %v1297 = vld [vmem:[%s3] sm:$0xf]
  %v1298 = vld [vmem:[%s3 + $0x4] sm:$0xf]
  %v1299 = vld [vmem:[%s3 + $0x8] sm:$0xf]
  %v1300 = vld [vmem:[%s3 + $0xc] sm:$0xf]
  %v1301 = vld [vmem:[%s3 + $0x10] sm:$0xf]
  %v1302 = vld [vmem:[%s3 + $0x14] sm:$0xf]
  %v1303 = vld [vmem:[%s3 + $0x18] sm:$0xf]
  %v1304 = vld [vmem:[%s3 + $0x1c] sm:$0xf]
  %v1305 = vld [vmem:[%s3 + $0x20] sm:$0xf]
  %v1306 = vld [vmem:[%s3 + $0x24] sm:$0xf]
  %v1307 = vld [vmem:[%s3 + $0x28] sm:$0xf]
  %v1308 = vld [vmem:[%s3 + $0x2c] sm:$0xf]
  %v1309 = vld [vmem:[%s3 + $0x30] sm:$0xf]
  %v1310 = vld [vmem:[%s3 + $0x34] sm:$0xf]
  %v1311 = vld [vmem:[%s3 + $0x38] sm:$0xf]
  %v1312 = vld [vmem:[%s3 + $0x3c] sm:$0xf]
  %v1313 = vld [vmem:[%s4] sm:$0xff]
  %v1322 = vunpack.c.l.b16 %v1289
  %v1323 = vunpack.c.l.b16 %v1290
  %v1324 = vunpack.c.l.b16 %v1291
  %v1325 = vunpack.c.l.b16 %v1292
  %v1326 = vunpack.c.l.b16 %v1293
  %v1327 = vunpack.c.l.b16 %v1294
  %v1328 = vunpack.c.l.b16 %v1295
  %v1329 = vunpack.c.l.b16 %v1296
  %vm1330 = vcmask 1041409
  %v1331 = vsel %vm1330, %v1323, %v1322
  %vm1332 = vcmask 1042434
  %v1333 = vsel %vm1332, %v1324, %v1331
  %vm1334 = vcmask 1043459
  %v1335 = vsel %vm1334, %v1325, %v1333
  %vm1336 = vcmask 1044484
  %v1337 = vsel %vm1336, %v1326, %v1335
  %vm1338 = vcmask 1045509
  %v1339 = vsel %vm1338, %v1327, %v1337
  %vm1340 = vcmask 1046534
  %v1341 = vsel %vm1340, %v1328, %v1339
  %vm1342 = vcmask 1047559
  %v1343 = vsel %vm1342, %v1329, %v1341
  %v1344 = vpack.c.b16 %v1343, %v1343
  %v1362 = vunpack.c.l.b16 %v1297
  %v1363 = vunpack.c.l.b16 %v1298
  %v1364 = vunpack.c.l.b16 %v1299
  %v1365 = vunpack.c.l.b16 %v1300
  %v1366 = vunpack.c.l.b16 %v1301
  %v1367 = vunpack.c.l.b16 %v1302
  %v1368 = vunpack.c.l.b16 %v1303
  %v1369 = vunpack.c.l.b16 %v1304
  %v1370 = vunpack.c.l.b16 %v1305
  %v1371 = vunpack.c.l.b16 %v1306
  %v1372 = vunpack.c.l.b16 %v1307
  %v1373 = vunpack.c.l.b16 %v1308
  %v1374 = vunpack.c.l.b16 %v1309
  %v1375 = vunpack.c.l.b16 %v1310
  %v1376 = vunpack.c.l.b16 %v1311
  %v1377 = vunpack.c.l.b16 %v1312
  %v1378 = vpack.c.b16 %v1363, %v1362
  %v1379 = vpack.c.b16 %v1365, %v1364
  %v1380 = vpack.c.b16 %v1367, %v1366
  %v1381 = vpack.c.b16 %v1369, %v1368
  %v1382 = vpack.c.b16 %v1371, %v1370
  %v1383 = vpack.c.b16 %v1373, %v1372
  %v1384 = vpack.c.b16 %v1375, %v1374
  %v1385 = vpack.c.b16 %v1377, %v1376
  %1394 = vmatprep.subr.bf16.mxu0 0
  %1395 = vmatpush1.bf16.msra.mxu0 %v1385
  %1396 = vmatprep.subr.bf16.mxu0 0
  %1397 = vmatpush1.bf16.msra.mxu0 %v1384
  %1398 = vmatprep.subr.bf16.mxu0 0
  %1399 = vmatpush1.bf16.msra.mxu0 %v1383
  %1400 = vmatprep.subr.bf16.mxu0 0
  %1401 = vmatpush1.bf16.msra.mxu0 %v1382
  %1402 = vmatprep.subr.bf16.mxu0 0
  %1403 = vmatpush1.bf16.msra.mxu0 %v1381
  %1404 = vmatprep.subr.bf16.mxu0 0
  %1405 = vmatpush1.bf16.msra.mxu0 %v1380
  %1406 = vmatprep.subr.bf16.mxu0 0
  %1407 = vmatpush1.bf16.msra.mxu0 %v1379
  %1408 = vmatprep.subr.bf16.mxu0 0
  %1409 = vmatpush1.bf16.msra.mxu0 %v1378
  %1410 = vmatprep.subr.bf16.mxu0 0
  %1411 = vmatpush2.bf16.msra.mxu0 0
  %1412 = vmatprep.subr.bf16.mxu0 0
  %1413 = vmatpush2.bf16.msra.mxu0 0
  %1414 = vmatprep.subr.bf16.mxu0 0
  %1415 = vmatpush2.bf16.msra.mxu0 0
  %1416 = vmatprep.subr.bf16.mxu0 0
  %1417 = vmatpush2.bf16.msra.mxu0 0
  %1418 = vmatprep.subr.bf16.mxu0 0
  %1419 = vmatpush2.bf16.msra.mxu0 0
  %1420 = vmatprep.subr.bf16.mxu0 0
  %1421 = vmatpush2.bf16.msra.mxu0 0
  %1422 = vmatprep.subr.bf16.mxu0 0
  %1423 = vmatpush2.bf16.msra.mxu0 0
  %1424 = vmatprep.subr.bf16.mxu0 0
  %1425 = vmatpush2.bf16.msra.mxu0 0
  %1426 = vmatprep.mubr.bf16.mxu0 0
  %1427 = vmatmul.mubr.bf16.gmra.mxu0 %v1344
  %v1428 = vpop.f32.mrf.mxu0
  %v1429 = vadd.f32 %v1313, %v1428
  %v1430 = vpop.f32.mrf.mxu0
  %v1431 = vpop.f32.mrf.mxu0
  %v1432 = vpop.f32.mrf.mxu0
  %1433 = vdwg.mxu0
  %1434 = vst [vmem:[%s6] sm:$0xff] %v1429
  %v1435 = vmul.f32 %v1429, %v1429
  %1436 = vadd.xlane.f32.xlu0 %v1435
  %v1437 = vpop.xlane.xlu0 %1436
  %v1438 = vadd.f32 %v1437, 1e-24
  %v1439 = vrsqrt.pop %v1438
  %v1440 = vmul.f32 %v1429, %v1439
  %v1441 = vpack.c.bf16 %v1440, %v1440
  %v1442 = vld [vmem:[%s5] sm:$0xf]
  %v1443 = vld [vmem:[%s5 + $0x4] sm:$0xf]
  %v1444 = vld [vmem:[%s5 + $0x8] sm:$0xf]
  %v1445 = vld [vmem:[%s5 + $0xc] sm:$0xf]
  %v1446 = vld [vmem:[%s5 + $0x10] sm:$0xf]
  %v1447 = vld [vmem:[%s5 + $0x14] sm:$0xf]
  %v1448 = vld [vmem:[%s5 + $0x18] sm:$0xf]
  %v1449 = vld [vmem:[%s5 + $0x1c] sm:$0xf]
  %v1450 = vld [vmem:[%s5 + $0x20] sm:$0xf]
  %v1451 = vld [vmem:[%s5 + $0x24] sm:$0xf]
  %v1452 = vld [vmem:[%s5 + $0x28] sm:$0xf]
  %v1453 = vld [vmem:[%s5 + $0x2c] sm:$0xf]
  %v1454 = vld [vmem:[%s5 + $0x30] sm:$0xf]
  %v1455 = vld [vmem:[%s5 + $0x34] sm:$0xf]
  %v1456 = vld [vmem:[%s5 + $0x38] sm:$0xf]
  %v1457 = vld [vmem:[%s5 + $0x3c] sm:$0xf]
  %v1474 = vunpack.c.l.b16 %v1442
  %v1475 = vunpack.c.l.b16 %v1443
  %v1476 = vunpack.c.l.b16 %v1444
  %v1477 = vunpack.c.l.b16 %v1445
  %v1478 = vunpack.c.l.b16 %v1446
  %v1479 = vunpack.c.l.b16 %v1447
  %v1480 = vunpack.c.l.b16 %v1448
  %v1481 = vunpack.c.l.b16 %v1449
  %v1482 = vunpack.c.l.b16 %v1450
  %v1483 = vunpack.c.l.b16 %v1451
  %v1484 = vunpack.c.l.b16 %v1452
  %v1485 = vunpack.c.l.b16 %v1453
  %v1486 = vunpack.c.l.b16 %v1454
  %v1487 = vunpack.c.l.b16 %v1455
  %v1488 = vunpack.c.l.b16 %v1456
  %v1489 = vunpack.c.l.b16 %v1457
  %v1490 = vpack.c.b16 %v1475, %v1474
  %v1491 = vpack.c.b16 %v1477, %v1476
  %v1492 = vpack.c.b16 %v1479, %v1478
  %v1493 = vpack.c.b16 %v1481, %v1480
  %v1494 = vpack.c.b16 %v1483, %v1482
  %v1495 = vpack.c.b16 %v1485, %v1484
  %v1496 = vpack.c.b16 %v1487, %v1486
  %v1497 = vpack.c.b16 %v1489, %v1488
  %1506 = vmatprep.subr.bf16.mxu0 0
  %1507 = vmatpush1.bf16.msra.mxu0 %v1497
  %1508 = vmatprep.subr.bf16.mxu0 0
  %1509 = vmatpush1.bf16.msra.mxu0 %v1496
  %1510 = vmatprep.subr.bf16.mxu0 0
  %1511 = vmatpush1.bf16.msra.mxu0 %v1495
  %1512 = vmatprep.subr.bf16.mxu0 0
  %1513 = vmatpush1.bf16.msra.mxu0 %v1494
  %1514 = vmatprep.subr.bf16.mxu0 0
  %1515 = vmatpush1.bf16.msra.mxu0 %v1493
  %1516 = vmatprep.subr.bf16.mxu0 0
  %1517 = vmatpush1.bf16.msra.mxu0 %v1492
  %1518 = vmatprep.subr.bf16.mxu0 0
  %1519 = vmatpush1.bf16.msra.mxu0 %v1491
  %1520 = vmatprep.subr.bf16.mxu0 0
  %1521 = vmatpush1.bf16.msra.mxu0 %v1490
  %1522 = vmatprep.subr.bf16.mxu0 0
  %1523 = vmatpush2.bf16.msra.mxu0 0
  %1524 = vmatprep.subr.bf16.mxu0 0
  %1525 = vmatpush2.bf16.msra.mxu0 0
  %1526 = vmatprep.subr.bf16.mxu0 0
  %1527 = vmatpush2.bf16.msra.mxu0 0
  %1528 = vmatprep.subr.bf16.mxu0 0
  %1529 = vmatpush2.bf16.msra.mxu0 0
  %1530 = vmatprep.subr.bf16.mxu0 0
  %1531 = vmatpush2.bf16.msra.mxu0 0
  %1532 = vmatprep.subr.bf16.mxu0 0
  %1533 = vmatpush2.bf16.msra.mxu0 0
  %1534 = vmatprep.subr.bf16.mxu0 0
  %1535 = vmatpush2.bf16.msra.mxu0 0
  %1536 = vmatprep.subr.bf16.mxu0 0
  %1537 = vmatpush2.bf16.msra.mxu0 0
  %1538 = vmatprep.mubr.bf16.mxu0 0
  %1539 = vmatmul.mubr.bf16.gmra.mxu0 %v1441
  %v1540 = vpop.f32.mrf.mxu0
  %v1541 = vadd.f32 0.0, %v1540
  %v1542 = vpop.f32.mrf.mxu0
  %v1543 = vpop.f32.mrf.mxu0
  %v1544 = vpop.f32.mrf.mxu0
  %1545 = vdwg.mxu0
  %v1546 = vmul.f32 %v1541, %v1541
  %v1547 = vsub.f32 1.0, %v1546
  %v1548 = vmax.f32 %v1547, 0.0
  %v1549 = vmin.f32 %v1548, 1.0
  %v1550 = vrsqrt.pop %v1549
  %v1551 = vmul.f32 %v1549, %v1550
  %vm1552 = vcmp.eq.f32.partialorder %v1549, inf
  %v1553 = vsel %vm1552, %v1549, %v1551
  %vm1554 = vcmp.eq.f32.partialorder %v1549, 0.0
  %v1555 = vand.u32 %v1549, 2147483648
  %v1556 = vsel %vm1554, %v1555, %v1553
  %v1557 = vmul.f32 %v1541, 0.87758255
  %v1558 = vmul.f32 %v1556, 0.47942555
  %v1559 = vsub.f32 %v1557, %v1558
  %vm1560 = vcmp.gt.f32.partialorder %v1541, -0.87758255
  %v1561 = vsub.f32 %v1541, 0.23971277
  %v1562 = vsel %vm1560, %v1559, %v1561
  %v1563 = vlaneseq
  %v1564 = vshrl.u32 %v1563, 7
  %v1565 = vlaneseq
  %v1566 = vand.u32 %v1565, 127
  %s1567 = smul.u32 0, 8
  %s1568 = sld [smem:[#allocation3 + %s1567]]
  %vm1569 = vcmp.eq.s32.totalorder %v1564, 0
  %v1570 = vstv %s1568
  %vm1571 = vcmp.eq.s32.totalorder %v1566, %v1570
  %vm1572 = vmand %vm1569, %vm1571
  %v1573 = vsel %vm1572, 1.0, 0.0
  %s1574 = sadd.s32 %s1567, 1
  %s1575 = sld [smem:[#allocation3 + %s1574]]
  %vm1576 = vcmp.eq.s32.totalorder %v1564, 1
  %v1577 = vstv %s1575
  %vm1578 = vcmp.eq.s32.totalorder %v1566, %v1577
  %vm1579 = vmand %vm1576, %vm1578
  %v1580 = vsel %vm1579, 1.0, %v1573
  %s1581 = sadd.s32 %s1567, 2
  %s1582 = sld [smem:[#allocation3 + %s1581]]
  %vm1583 = vcmp.eq.s32.totalorder %v1564, 2
  %v1584 = vstv %s1582
  %vm1585 = vcmp.eq.s32.totalorder %v1566, %v1584
  %vm1586 = vmand %vm1583, %vm1585
  %v1587 = vsel %vm1586, 1.0, %v1580
  %s1588 = sadd.s32 %s1567, 3
  %s1589 = sld [smem:[#allocation3 + %s1588]]
  %vm1590 = vcmp.eq.s32.totalorder %v1564, 3
  %v1591 = vstv %s1589
  %vm1592 = vcmp.eq.s32.totalorder %v1566, %v1591
  %vm1593 = vmand %vm1590, %vm1592
  %v1594 = vsel %vm1593, 1.0, %v1587
  %s1595 = sadd.s32 %s1567, 4
  %s1596 = sld [smem:[#allocation3 + %s1595]]
  %vm1597 = vcmp.eq.s32.totalorder %v1564, 4
  %v1598 = vstv %s1596
  %vm1599 = vcmp.eq.s32.totalorder %v1566, %v1598
  %vm1600 = vmand %vm1597, %vm1599
  %v1601 = vsel %vm1600, 1.0, %v1594
  %s1602 = sadd.s32 %s1567, 5
  %s1603 = sld [smem:[#allocation3 + %s1602]]
  %vm1604 = vcmp.eq.s32.totalorder %v1564, 5
  %v1605 = vstv %s1603
  %vm1606 = vcmp.eq.s32.totalorder %v1566, %v1605
  %vm1607 = vmand %vm1604, %vm1606
  %v1608 = vsel %vm1607, 1.0, %v1601
  %s1609 = sadd.s32 %s1567, 6
  %s1610 = sld [smem:[#allocation3 + %s1609]]
  %vm1611 = vcmp.eq.s32.totalorder %v1564, 6
  %v1612 = vstv %s1610
  %vm1613 = vcmp.eq.s32.totalorder %v1566, %v1612
  %vm1614 = vmand %vm1611, %vm1613
  %v1615 = vsel %vm1614, 1.0, %v1608
  %s1616 = sadd.s32 %s1567, 7
  %s1617 = sld [smem:[#allocation3 + %s1616]]
  %vm1618 = vcmp.eq.s32.totalorder %v1564, 7
  %v1619 = vstv %s1617
  %vm1620 = vcmp.eq.s32.totalorder %v1566, %v1619
  %vm1621 = vmand %vm1618, %vm1620
  %v1622 = vsel %vm1621, 1.0, %v1615
  %v1623 = vsub.f32 %v1562, %v1541
  %v1624 = vmul.f32 %v1622, %v1623
  %v1625 = vadd.f32 %v1541, %v1624
  %v1626 = vmul.f32 %v1625, 30.0
  %1627 = vst [vmem:[%s7] sm:$0xff] %v1626
  // Predicated region
  $region22: #{fused_forward_arc.1} parent=0 // pred_check
    _
  $region23: #{fused_forward_arc.1} parent=0 // pred_check_branch
    %1629 = sbr.rel (0) target = $region25
  $region24: #{fused_forward_arc.1} parent=0 // pred_region
    _
  $region25: #{fused_forward_arc.1} parent=0 // pred_fallthru
    _
  // Predicated region
  $region26: #{fused_forward_arc.1} parent=0 // pred_check
    _
  $region27: #{fused_forward_arc.1} parent=0 // pred_check_branch
    %1631 = sbr.rel (0) target = $region29
  $region28: #{fused_forward_arc.1} parent=0 // pred_region
    _
  $region29: #{fused_forward_arc.1} parent=0 // pred_fallthru
    _
  // Predicated region
  $region30: #{fused_forward_arc.1} parent=0 // pred_check
    _
  $region31: #{fused_forward_arc.1} parent=0 // pred_check_branch
    %1633 = sbr.rel (0) target = $region33
  $region32: #{fused_forward_arc.1} parent=0 // pred_region
    _
  $region33: #{fused_forward_arc.1} parent=0 // pred_fallthru
    _
  // Predicated region
  $region34: #{fused_forward_arc.1} parent=0 // pred_check
    _
  $region35: #{fused_forward_arc.1} parent=0 // pred_check_branch
    %1635 = sbr.rel (0) target = $region37
  $region36: #{fused_forward_arc.1} parent=0 // pred_region
    _
  $region37: #{fused_forward_arc.1} parent=0 // pred_fallthru
    _

</llo_original>
